<compile_context>
chip_gen: v5e
topology: v5e:2x2
jax: 0.10.0
libtpu: 0.0.40
codegen_flags: <defaults>
</compile_context>

<pallas_src>
import functools

import jax
import jax.numpy as jnp
from jax.experimental import pallas as pl
from jax.experimental.pallas import tpu as pltpu

# ----------------------- small T5-like configuration -----------------------
VOCAB = 100
D_MODEL = 32
N_HEADS = 4
D_KV = 8            # inner_dim = N_HEADS * D_KV == D_MODEL
D_FF = 64
N_LAYERS = 2
N_BUCKETS = 32
MAX_DIST = 128
N_CLASSES = 2
EPS = 1e-6
INNER = N_HEADS * D_KV
NEG_INF = -1e9


# ------------------------- the single fused kernel --------------------------
def _t5_forward_kernel(h_ref, biasmask_ref, lns_ref, wqkv_ref, wi_ref, wod_ref,
                       cls_ref, o_ref, *, batch, seq):
    """Whole T5-encoder + mean-pool + classifier forward, fully resident in VMEM.

    h_ref       : (B*S, D)   f32   token embeddings
    biasmask_ref: (H, B*S, B*S) f32  block-diagonal relative-position bias
                                     (bias on diagonal S x S blocks, -1e9 off-block)
    lns_ref     : (2L+1, D)  f32   RMSNorm weights: [ln1_0, ln2_0, ..., final_ln]
    wqkv_ref    : (L, D, 3*INNER)  bf16  fused q/k/v projection
    wi_ref      : (L, D, FF)       bf16  FF in-projection
    wod_ref     : (L, INNER+FF, D) bf16  [wo ; wo_ff] stacked along sublanes
    cls_ref     : (D+1, 2)   f32   [cls_w ; cls_b]
    o_ref       : (B, 2)     f32   logits
    """
    f32 = jnp.float32
    bf16 = jnp.bfloat16

    def rms(x, w):  # T5 LayerNorm: no mean subtraction, no bias.  w: (1, D) f32
        var = jnp.mean(x * x, axis=-1, keepdims=True)
        return x * jax.lax.rsqrt(var + EPS) * w

    h = h_ref[...]                                               # (B*S, D), f32

    for l in range(N_LAYERS):
        # ---------- self-attention sublayer (pre-norm, residual, eval mode) ------
        normed = rms(h, lns_ref[2 * l:2 * l + 1, :])
        qkv = jnp.dot(normed.astype(bf16), wqkv_ref[l],
                      preferred_element_type=f32)                # (B*S, 3*INNER) f32

        wod_l = wod_ref[l]                                       # (INNER+FF, D) bf16
        ctx_heads = []
        for hd in range(N_HEADS):
            c0 = hd * D_KV
            q_h = qkv[:, 0 * INNER + c0: 0 * INNER + c0 + D_KV]  # (B*S, d_kv)
            k_h = qkv[:, 1 * INNER + c0: 1 * INNER + c0 + D_KV]
            v_h = qkv[:, 2 * INNER + c0: 2 * INNER + c0 + D_KV]
            # T5 attention: NO 1/sqrt(d_kv) scaling; additive relative bias.
            # One (B*S, B*S) matmul per head; block-diag -1e9 mask keeps batches
            # from attending to each other, so softmax == per-batch softmax.
            scores = jax.lax.dot_general(
                q_h.astype(bf16), k_h.astype(bf16), (((1,), (1,)), ((), ())),
                preferred_element_type=f32) + biasmask_ref[hd]
            m = jnp.max(scores, axis=-1, keepdims=True)
            e = jnp.exp(scores - m)
            p = e * pl.reciprocal(jnp.sum(e, axis=-1, keepdims=True), approx=True)
            ctx_heads.append(jnp.dot(p.astype(bf16), v_h.astype(bf16),
                                     preferred_element_type=f32))
        ctx = jnp.concatenate(ctx_heads, axis=1)                 # (B*S, INNER), vregs

        wo = wod_l[0:INNER, :]                                   # (INNER, D) bf16
        h = h + jnp.dot(ctx.astype(bf16), wo, preferred_element_type=f32)

        # ---------- feed-forward sublayer (ReLU dense-act, residual) -------------
        normed = rms(h, lns_ref[2 * l + 1:2 * l + 2, :])
        ff = jnp.maximum(
            jnp.dot(normed.astype(bf16), wi_ref[l], preferred_element_type=f32), 0.0)
        woff = wod_l[INNER:INNER + D_FF, :]                      # (FF, D) bf16
        h = h + jnp.dot(ff.astype(bf16), woff, preferred_element_type=f32)

    # final encoder RMSNorm
    h = rms(h, lns_ref[2 * N_LAYERS:2 * N_LAYERS + 1, :])

    # mean-pool over seq: per-batch sublane reduction (no pool matrix input)
    pooled = jnp.concatenate(
        [jnp.sum(h[b * seq:(b + 1) * seq, :], axis=0, keepdims=True)
         for b in range(batch)], axis=0) * (1.0 / seq)           # (B, D) f32

    cls_w = cls_ref[0:D_MODEL, :]                                # (D, 2) f32
    cls_b = cls_ref[D_MODEL:D_MODEL + 1, :]                      # (1, 2) f32
    o_ref[...] = (jnp.dot(pooled.astype(bf16), cls_w.astype(bf16),
                          preferred_element_type=f32) + cls_b)


# ------------------------- plain-JAX glue (no hot path) ---------------------
def _relative_position_bucket(relative_position, num_buckets=N_BUCKETS, max_distance=MAX_DIST):
    # bidirectional (encoder) bucketing, mirrors HF T5Attention._relative_position_bucket
    num_buckets //= 2
    ret = (relative_position > 0).astype(jnp.int32) * num_buckets
    n = jnp.abs(relative_position)
    max_exact = num_buckets // 2
    is_small = n < max_exact
    n_safe = jnp.maximum(n, 1)  # avoid log(0) in the (masked-out) large branch
    val_if_large = max_exact + (
        jnp.log(n_safe.astype(jnp.float32) / max_exact)
        / jnp.log(max_distance / max_exact)
        * (num_buckets - max_exact)
    ).astype(jnp.int32)
    val_if_large = jnp.minimum(val_if_large, num_buckets - 1)
    ret = ret + jnp.where(is_small, n, val_if_large)
    return ret


def compute_position_bias(rel_table, seq_len):
    context = jnp.arange(seq_len)[:, None]
    memory = jnp.arange(seq_len)[None, :]
    rel_pos = memory - context                              # (S, S)
    buckets = _relative_position_bucket(rel_pos)            # (S, S)
    values = jnp.take(rel_table, buckets, axis=0)           # (S, S, H)
    return jnp.transpose(values, (2, 0, 1)).astype(jnp.float32)   # (H, S, S)


def build_bias_mask(bias, batch, seq):
    """(H, B*S, B*S): relative bias on diagonal SxS blocks, -1e9 off-block."""
    on_block = jnp.kron(jnp.eye(batch, dtype=jnp.float32),
                        jnp.ones((seq, seq), jnp.float32))       # (B*S, B*S)
    tiled = jnp.tile(bias, (1, batch, batch))                    # (H, B*S, B*S)
    return jnp.where(on_block[None] > 0, tiled, NEG_INF)


def init_params(key):
    def nrm(key, shape, scale=0.05):
        return scale * jax.random.normal(key, shape, dtype=jnp.float32)

    keys = jax.random.split(key, 4 + 6 * N_LAYERS)
    params = {
        "embed": nrm(keys[0], (VOCAB, D_MODEL)),
        "rel_bias": nrm(keys[1], (N_BUCKETS, N_HEADS)),
        "final_ln": jnp.ones((D_MODEL,), jnp.float32),
        "cls_w": nrm(keys[2], (D_MODEL, N_CLASSES)),
        "cls_b": nrm(keys[3], (N_CLASSES,)),
        "layers": [],
    }
    for l in range(N_LAYERS):
        k = keys[4 + 6 * l: 4 + 6 * (l + 1)]
        params["layers"].append({
            "ln1": jnp.ones((D_MODEL,), jnp.float32),
            "wq": nrm(k[0], (D_MODEL, INNER)),
            "wk": nrm(k[1], (D_MODEL, INNER)),
            "wv": nrm(k[2], (D_MODEL, INNER)),
            "wo": nrm(k[3], (INNER, D_MODEL)),
            "ln2": jnp.ones((D_MODEL,), jnp.float32),
            "wi": nrm(k[4], (D_MODEL, D_FF)),
            "wo_ff": nrm(k[5], (D_FF, D_MODEL)),
        })
    return params


def t5_finetuner_forward(params, input_ids):
    """Equivalent of T5FineTuner.forward(input_ids): T5 encoder -> mean(dim=1) -> Linear(d,2)."""
    B, S = input_ids.shape

    # TODO(synk): embedding gather stays in plain JAX (data-dependent gather).
    h = jnp.take(params["embed"], input_ids, axis=0).astype(jnp.float32)   # (B, S, D)
    h2 = h.reshape(B * S, D_MODEL)

    # Relative position bias (computed once, shared by all layers — HF behavior),
    # folded together with the block-diagonal batch mask into one (H, B*S, B*S) add.
    pos_bias = compute_position_bias(params["rel_bias"], S)                 # (H, S, S)
    biasmask = build_bias_mask(pos_bias, B, S)                              # (H, B*S, B*S)

    # Pack per-layer weights into few stacked tensors (fewer DMAs); MXU operands
    # are stored in bf16, RMSNorm weights and classifier bias stay f32.
    layers = params["layers"]
    lns = jnp.concatenate(
        sum([[l["ln1"][None, :], l["ln2"][None, :]] for l in layers], [])
        + [params["final_ln"][None, :]], axis=0)                            # (2L+1, D)
    wqkv = jnp.stack([jnp.concatenate([l["wq"], l["wk"], l["wv"]], axis=1)
                      for l in layers]).astype(jnp.bfloat16)                # (L, D, 3*INNER)
    wi = jnp.stack([l["wi"] for l in layers]).astype(jnp.bfloat16)          # (L, D, FF)
    wod = jnp.stack([jnp.concatenate([l["wo"], l["wo_ff"]], axis=0)
                     for l in layers]).astype(jnp.bfloat16)                 # (L, INNER+FF, D)
    cls = jnp.concatenate([params["cls_w"], params["cls_b"][None, :]],
                          axis=0)                                           # (D+1, 2)

    kernel = functools.partial(_t5_forward_kernel, batch=B, seq=S)
    vmem = pltpu.MemorySpace.VMEM
    return pl.pallas_call(
        kernel,
        out_shape=jax.ShapeDtypeStruct((B, N_CLASSES), jnp.float32),
        in_specs=[pl.BlockSpec(memory_space=vmem)] * 7,
        out_specs=pl.BlockSpec(memory_space=vmem),
    )(h2, biasmask, lns, wqkv, wi, wod, cls)


if __name__ == "__main__":
    key = jax.random.PRNGKey(0)
    pkey, dkey = jax.random.split(key)
    params = init_params(pkey)

    B, S = 2, 8
    input_ids = jax.random.randint(dkey, (B, S), 0, VOCAB, dtype=jnp.int32)

    forward = jax.jit(t5_finetuner_forward)
    logits = forward(params, input_ids)
    jax.block_until_ready(logits)
    assert logits.shape == (B, N_CLASSES) and logits.dtype == jnp.float32
    assert bool(jnp.all(jnp.isfinite(logits)))
    print("KERNEL_OK")
</pallas_src>

<mosaic_0001>
module attributes {stable_mosaic.version = 11 : i64} {
  func.func @_t5_forward_kernel(%arg0: memref<16x32xf32, #tpu.memory_space<vmem>>, %arg1: memref<4x16x16xf32, #tpu.memory_space<vmem>>, %arg2: memref<5x32xf32, #tpu.memory_space<vmem>>, %arg3: memref<2x32x96xbf16, #tpu.memory_space<vmem>>, %arg4: memref<2x32x64xbf16, #tpu.memory_space<vmem>>, %arg5: memref<2x96x32xbf16, #tpu.memory_space<vmem>>, %arg6: memref<33x2xf32, #tpu.memory_space<vmem>>, %arg7: memref<2x2xf32, #tpu.memory_space<vmem>>) attributes {dimension_semantics = [], scalar_prefetch = 0 : i64, scratch_operands = 0 : i64, tpu.core_type = #tpu.core_type<tc>} {
    %c0 = arith.constant 0 : index
    %c0_0 = arith.constant 0 : index
    %0 = vector.load %arg0[%c0, %c0_0] : memref<16x32xf32, #tpu.memory_space<vmem>>, vector<16x32xf32>
    %c0_1 = arith.constant 0 : index
    %c0_2 = arith.constant 0 : index
    %1 = vector.load %arg2[%c0_1, %c0_2] : memref<5x32xf32, #tpu.memory_space<vmem>>, vector<1x32xf32>
    %2 = arith.mulf %0, %0 : vector<16x32xf32>
    %cst = arith.constant dense<0.000000e+00> : vector<16xf32>
    %3 = vector.multi_reduction <add>, %2, %cst [1] : vector<16x32xf32> to vector<16xf32>
    %4 = vector.shape_cast %3 : vector<16xf32> to vector<16x1xf32>
    %cst_3 = arith.constant 3.200000e+01 : f32
    %5 = vector.broadcast %cst_3 : f32 to vector<16x1xf32>
    %6 = arith.divf %4, %5 : vector<16x1xf32>
    %cst_4 = arith.constant 9.99999997E-7 : f32
    %7 = vector.broadcast %cst_4 : f32 to vector<16x1xf32>
    %8 = arith.addf %6, %7 : vector<16x1xf32>
    %9 = math.rsqrt %8 : vector<16x1xf32>
    %10 = vector.broadcast %9 : vector<16x1xf32> to vector<16x32xf32>
    %11 = arith.mulf %0, %10 : vector<16x32xf32>
    %12 = vector.broadcast %1 : vector<1x32xf32> to vector<16x32xf32>
    %13 = arith.mulf %11, %12 : vector<16x32xf32>
    %14 = arith.truncf %13 : vector<16x32xf32> to vector<16x32xbf16>
    %c0_5 = arith.constant 0 : index
    %c0_6 = arith.constant 0 : index
    %c0_7 = arith.constant 0 : index
    %15 = vector.load %arg3[%c0_5, %c0_6, %c0_7] : memref<2x32x96xbf16, #tpu.memory_space<vmem>>, vector<1x32x96xbf16>
    %16 = vector.shape_cast %15 : vector<1x32x96xbf16> to vector<32x96xbf16>
    %cst_8 = arith.constant dense<0.000000e+00> : vector<16x96xf32>
    %17 = tpu.matmul %14, %16, %cst_8 {dimension_numbers = #tpu.dot_dimension_numbers<[1], [0], [0], [1], [0, 0, 1, 1], [], []>} : vector<16x32xbf16>, vector<32x96xbf16>, vector<16x96xf32> -> vector<16x96xf32>
    %c0_9 = arith.constant 0 : index
    %c0_10 = arith.constant 0 : index
    %c0_11 = arith.constant 0 : index
    %18 = vector.load %arg5[%c0_9, %c0_10, %c0_11] : memref<2x96x32xbf16, #tpu.memory_space<vmem>>, vector<1x96x32xbf16>
    %19 = vector.shape_cast %18 : vector<1x96x32xbf16> to vector<96x32xbf16>
    %20 = vector.extract_strided_slice %17 {offsets = [0, 0], sizes = [16, 8], strides = [1, 1]} : vector<16x96xf32> to vector<16x8xf32>
    %21 = vector.extract_strided_slice %17 {offsets = [0, 32], sizes = [16, 8], strides = [1, 1]} : vector<16x96xf32> to vector<16x8xf32>
    %22 = vector.extract_strided_slice %17 {offsets = [0, 64], sizes = [16, 8], strides = [1, 1]} : vector<16x96xf32> to vector<16x8xf32>
    %23 = arith.truncf %20 : vector<16x8xf32> to vector<16x8xbf16>
    %24 = arith.truncf %21 : vector<16x8xf32> to vector<16x8xbf16>
    %cst_12 = arith.constant dense<0.000000e+00> : vector<16x16xf32>
    %25 = tpu.matmul %23, %24, %cst_12 {dimension_numbers = #tpu.dot_dimension_numbers<[1], [1], [0], [0], [0, 0, 1, 0], [], []>} : vector<16x8xbf16>, vector<16x8xbf16>, vector<16x16xf32> -> vector<16x16xf32>
    %c0_13 = arith.constant 0 : index
    %c0_14 = arith.constant 0 : index
    %c0_15 = arith.constant 0 : index
    %26 = vector.load %arg1[%c0_13, %c0_14, %c0_15] : memref<4x16x16xf32, #tpu.memory_space<vmem>>, vector<1x16x16xf32>
    %27 = vector.shape_cast %26 : vector<1x16x16xf32> to vector<16x16xf32>
    %28 = arith.addf %25, %27 : vector<16x16xf32>
    %cst_16 = arith.constant dense<0xFF800000> : vector<16xf32>
    %29 = vector.multi_reduction <maximumf>, %28, %cst_16 [1] : vector<16x16xf32> to vector<16xf32>
    %30 = vector.shape_cast %29 : vector<16xf32> to vector<16x1xf32>
    %31 = vector.broadcast %30 : vector<16x1xf32> to vector<16x16xf32>
    %32 = arith.subf %28, %31 : vector<16x16xf32>
    %33 = math.exp %32 : vector<16x16xf32>
    %cst_17 = arith.constant dense<0.000000e+00> : vector<16xf32>
    %34 = vector.multi_reduction <add>, %33, %cst_17 [1] : vector<16x16xf32> to vector<16xf32>
    %35 = vector.shape_cast %34 : vector<16xf32> to vector<16x1xf32>
    %36 = tpu.reciprocal %35 {approx = true} : vector<16x1xf32> -> vector<16x1xf32>
    %37 = vector.broadcast %36 : vector<16x1xf32> to vector<16x16xf32>
    %38 = arith.mulf %33, %37 : vector<16x16xf32>
    %39 = arith.truncf %38 : vector<16x16xf32> to vector<16x16xbf16>
    %40 = arith.truncf %22 : vector<16x8xf32> to vector<16x8xbf16>
    %cst_18 = arith.constant dense<0.000000e+00> : vector<16x8xf32>
    %41 = tpu.matmul %39, %40, %cst_18 {dimension_numbers = #tpu.dot_dimension_numbers<[1], [0], [0], [1], [0, 0, 1, 1], [], []>} : vector<16x16xbf16>, vector<16x8xbf16>, vector<16x8xf32> -> vector<16x8xf32>
    %42 = vector.extract_strided_slice %17 {offsets = [0, 8], sizes = [16, 8], strides = [1, 1]} : vector<16x96xf32> to vector<16x8xf32>
    %43 = vector.extract_strided_slice %17 {offsets = [0, 40], sizes = [16, 8], strides = [1, 1]} : vector<16x96xf32> to vector<16x8xf32>
    %44 = vector.extract_strided_slice %17 {offsets = [0, 72], sizes = [16, 8], strides = [1, 1]} : vector<16x96xf32> to vector<16x8xf32>
    %45 = arith.truncf %42 : vector<16x8xf32> to vector<16x8xbf16>
    %46 = arith.truncf %43 : vector<16x8xf32> to vector<16x8xbf16>
    %cst_19 = arith.constant dense<0.000000e+00> : vector<16x16xf32>
    %47 = tpu.matmul %45, %46, %cst_19 {dimension_numbers = #tpu.dot_dimension_numbers<[1], [1], [0], [0], [0, 0, 1, 0], [], []>} : vector<16x8xbf16>, vector<16x8xbf16>, vector<16x16xf32> -> vector<16x16xf32>
    %c1 = arith.constant 1 : index
    %c0_20 = arith.constant 0 : index
    %c0_21 = arith.constant 0 : index
    %48 = vector.load %arg1[%c1, %c0_20, %c0_21] : memref<4x16x16xf32, #tpu.memory_space<vmem>>, vector<1x16x16xf32>
    %49 = vector.shape_cast %48 : vector<1x16x16xf32> to vector<16x16xf32>
    %50 = arith.addf %47, %49 : vector<16x16xf32>
    %cst_22 = arith.constant dense<0xFF800000> : vector<16xf32>
    %51 = vector.multi_reduction <maximumf>, %50, %cst_22 [1] : vector<16x16xf32> to vector<16xf32>
    %52 = vector.shape_cast %51 : vector<16xf32> to vector<16x1xf32>
    %53 = vector.broadcast %52 : vector<16x1xf32> to vector<16x16xf32>
    %54 = arith.subf %50, %53 : vector<16x16xf32>
    %55 = math.exp %54 : vector<16x16xf32>
    %cst_23 = arith.constant dense<0.000000e+00> : vector<16xf32>
    %56 = vector.multi_reduction <add>, %55, %cst_23 [1] : vector<16x16xf32> to vector<16xf32>
    %57 = vector.shape_cast %56 : vector<16xf32> to vector<16x1xf32>
    %58 = tpu.reciprocal %57 {approx = true} : vector<16x1xf32> -> vector<16x1xf32>
    %59 = vector.broadcast %58 : vector<16x1xf32> to vector<16x16xf32>
    %60 = arith.mulf %55, %59 : vector<16x16xf32>
    %61 = arith.truncf %60 : vector<16x16xf32> to vector<16x16xbf16>
    %62 = arith.truncf %44 : vector<16x8xf32> to vector<16x8xbf16>
    %cst_24 = arith.constant dense<0.000000e+00> : vector<16x8xf32>
    %63 = tpu.matmul %61, %62, %cst_24 {dimension_numbers = #tpu.dot_dimension_numbers<[1], [0], [0], [1], [0, 0, 1, 1], [], []>} : vector<16x16xbf16>, vector<16x8xbf16>, vector<16x8xf32> -> vector<16x8xf32>
    %64 = vector.extract_strided_slice %17 {offsets = [0, 16], sizes = [16, 8], strides = [1, 1]} : vector<16x96xf32> to vector<16x8xf32>
    %65 = vector.extract_strided_slice %17 {offsets = [0, 48], sizes = [16, 8], strides = [1, 1]} : vector<16x96xf32> to vector<16x8xf32>
    %66 = vector.extract_strided_slice %17 {offsets = [0, 80], sizes = [16, 8], strides = [1, 1]} : vector<16x96xf32> to vector<16x8xf32>
    %67 = arith.truncf %64 : vector<16x8xf32> to vector<16x8xbf16>
    %68 = arith.truncf %65 : vector<16x8xf32> to vector<16x8xbf16>
    %cst_25 = arith.constant dense<0.000000e+00> : vector<16x16xf32>
    %69 = tpu.matmul %67, %68, %cst_25 {dimension_numbers = #tpu.dot_dimension_numbers<[1], [1], [0], [0], [0, 0, 1, 0], [], []>} : vector<16x8xbf16>, vector<16x8xbf16>, vector<16x16xf32> -> vector<16x16xf32>
    %c2 = arith.constant 2 : index
    %c0_26 = arith.constant 0 : index
    %c0_27 = arith.constant 0 : index
    %70 = vector.load %arg1[%c2, %c0_26, %c0_27] : memref<4x16x16xf32, #tpu.memory_space<vmem>>, vector<1x16x16xf32>
    %71 = vector.shape_cast %70 : vector<1x16x16xf32> to vector<16x16xf32>
    %72 = arith.addf %69, %71 : vector<16x16xf32>
    %cst_28 = arith.constant dense<0xFF800000> : vector<16xf32>
    %73 = vector.multi_reduction <maximumf>, %72, %cst_28 [1] : vector<16x16xf32> to vector<16xf32>
    %74 = vector.shape_cast %73 : vector<16xf32> to vector<16x1xf32>
    %75 = vector.broadcast %74 : vector<16x1xf32> to vector<16x16xf32>
    %76 = arith.subf %72, %75 : vector<16x16xf32>
    %77 = math.exp %76 : vector<16x16xf32>
    %cst_29 = arith.constant dense<0.000000e+00> : vector<16xf32>
    %78 = vector.multi_reduction <add>, %77, %cst_29 [1] : vector<16x16xf32> to vector<16xf32>
    %79 = vector.shape_cast %78 : vector<16xf32> to vector<16x1xf32>
    %80 = tpu.reciprocal %79 {approx = true} : vector<16x1xf32> -> vector<16x1xf32>
    %81 = vector.broadcast %80 : vector<16x1xf32> to vector<16x16xf32>
    %82 = arith.mulf %77, %81 : vector<16x16xf32>
    %83 = arith.truncf %82 : vector<16x16xf32> to vector<16x16xbf16>
    %84 = arith.truncf %66 : vector<16x8xf32> to vector<16x8xbf16>
    %cst_30 = arith.constant dense<0.000000e+00> : vector<16x8xf32>
    %85 = tpu.matmul %83, %84, %cst_30 {dimension_numbers = #tpu.dot_dimension_numbers<[1], [0], [0], [1], [0, 0, 1, 1], [], []>} : vector<16x16xbf16>, vector<16x8xbf16>, vector<16x8xf32> -> vector<16x8xf32>
    %86 = vector.extract_strided_slice %17 {offsets = [0, 24], sizes = [16, 8], strides = [1, 1]} : vector<16x96xf32> to vector<16x8xf32>
    %87 = vector.extract_strided_slice %17 {offsets = [0, 56], sizes = [16, 8], strides = [1, 1]} : vector<16x96xf32> to vector<16x8xf32>
    %88 = vector.extract_strided_slice %17 {offsets = [0, 88], sizes = [16, 8], strides = [1, 1]} : vector<16x96xf32> to vector<16x8xf32>
    %89 = arith.truncf %86 : vector<16x8xf32> to vector<16x8xbf16>
    %90 = arith.truncf %87 : vector<16x8xf32> to vector<16x8xbf16>
    %cst_31 = arith.constant dense<0.000000e+00> : vector<16x16xf32>
    %91 = tpu.matmul %89, %90, %cst_31 {dimension_numbers = #tpu.dot_dimension_numbers<[1], [1], [0], [0], [0, 0, 1, 0], [], []>} : vector<16x8xbf16>, vector<16x8xbf16>, vector<16x16xf32> -> vector<16x16xf32>
    %c3 = arith.constant 3 : index
    %c0_32 = arith.constant 0 : index
    %c0_33 = arith.constant 0 : index
    %92 = vector.load %arg1[%c3, %c0_32, %c0_33] : memref<4x16x16xf32, #tpu.memory_space<vmem>>, vector<1x16x16xf32>
    %93 = vector.shape_cast %92 : vector<1x16x16xf32> to vector<16x16xf32>
    %94 = arith.addf %91, %93 : vector<16x16xf32>
    %cst_34 = arith.constant dense<0xFF800000> : vector<16xf32>
    %95 = vector.multi_reduction <maximumf>, %94, %cst_34 [1] : vector<16x16xf32> to vector<16xf32>
    %96 = vector.shape_cast %95 : vector<16xf32> to vector<16x1xf32>
    %97 = vector.broadcast %96 : vector<16x1xf32> to vector<16x16xf32>
    %98 = arith.subf %94, %97 : vector<16x16xf32>
    %99 = math.exp %98 : vector<16x16xf32>
    %cst_35 = arith.constant dense<0.000000e+00> : vector<16xf32>
    %100 = vector.multi_reduction <add>, %99, %cst_35 [1] : vector<16x16xf32> to vector<16xf32>
    %101 = vector.shape_cast %100 : vector<16xf32> to vector<16x1xf32>
    %102 = tpu.reciprocal %101 {approx = true} : vector<16x1xf32> -> vector<16x1xf32>
    %103 = vector.broadcast %102 : vector<16x1xf32> to vector<16x16xf32>
    %104 = arith.mulf %99, %103 : vector<16x16xf32>
    %105 = arith.truncf %104 : vector<16x16xf32> to vector<16x16xbf16>
    %106 = arith.truncf %88 : vector<16x8xf32> to vector<16x8xbf16>
    %cst_36 = arith.constant dense<0.000000e+00> : vector<16x8xf32>
    %107 = tpu.matmul %105, %106, %cst_36 {dimension_numbers = #tpu.dot_dimension_numbers<[1], [0], [0], [1], [0, 0, 1, 1], [], []>} : vector<16x16xbf16>, vector<16x8xbf16>, vector<16x8xf32> -> vector<16x8xf32>
    %108 = tpu.concatenate %41, %63, %85, %107 in 1 : vector<16x8xf32>, vector<16x8xf32>, vector<16x8xf32>, vector<16x8xf32> -> vector<16x32xf32>
    %109 = vector.extract_strided_slice %19 {offsets = [0, 0], sizes = [32, 32], strides = [1, 1]} : vector<96x32xbf16> to vector<32x32xbf16>
    %110 = arith.truncf %108 : vector<16x32xf32> to vector<16x32xbf16>
    %cst_37 = arith.constant dense<0.000000e+00> : vector<16x32xf32>
    %111 = tpu.matmul %110, %109, %cst_37 {dimension_numbers = #tpu.dot_dimension_numbers<[1], [0], [0], [1], [0, 0, 1, 1], [], []>} : vector<16x32xbf16>, vector<32x32xbf16>, vector<16x32xf32> -> vector<16x32xf32>
    %112 = arith.addf %0, %111 : vector<16x32xf32>
    %c1_38 = arith.constant 1 : index
    %c0_39 = arith.constant 0 : index
    %113 = vector.load %arg2[%c1_38, %c0_39] : memref<5x32xf32, #tpu.memory_space<vmem>>, vector<1x32xf32>
    %114 = arith.mulf %112, %112 : vector<16x32xf32>
    %cst_40 = arith.constant dense<0.000000e+00> : vector<16xf32>
    %115 = vector.multi_reduction <add>, %114, %cst_40 [1] : vector<16x32xf32> to vector<16xf32>
    %116 = vector.shape_cast %115 : vector<16xf32> to vector<16x1xf32>
    %cst_41 = arith.constant 3.200000e+01 : f32
    %117 = vector.broadcast %cst_41 : f32 to vector<16x1xf32>
    %118 = arith.divf %116, %117 : vector<16x1xf32>
    %cst_42 = arith.constant 9.99999997E-7 : f32
    %119 = vector.broadcast %cst_42 : f32 to vector<16x1xf32>
    %120 = arith.addf %118, %119 : vector<16x1xf32>
    %121 = math.rsqrt %120 : vector<16x1xf32>
    %122 = vector.broadcast %121 : vector<16x1xf32> to vector<16x32xf32>
    %123 = arith.mulf %112, %122 : vector<16x32xf32>
    %124 = vector.broadcast %113 : vector<1x32xf32> to vector<16x32xf32>
    %125 = arith.mulf %123, %124 : vector<16x32xf32>
    %126 = arith.truncf %125 : vector<16x32xf32> to vector<16x32xbf16>
    %c0_43 = arith.constant 0 : index
    %c0_44 = arith.constant 0 : index
    %c0_45 = arith.constant 0 : index
    %127 = vector.load %arg4[%c0_43, %c0_44, %c0_45] : memref<2x32x64xbf16, #tpu.memory_space<vmem>>, vector<1x32x64xbf16>
    %128 = vector.shape_cast %127 : vector<1x32x64xbf16> to vector<32x64xbf16>
    %cst_46 = arith.constant dense<0.000000e+00> : vector<16x64xf32>
    %129 = tpu.matmul %126, %128, %cst_46 {dimension_numbers = #tpu.dot_dimension_numbers<[1], [0], [0], [1], [0, 0, 1, 1], [], []>} : vector<16x32xbf16>, vector<32x64xbf16>, vector<16x64xf32> -> vector<16x64xf32>
    %cst_47 = arith.constant 0.000000e+00 : f32
    %130 = vector.broadcast %cst_47 : f32 to vector<16x64xf32>
    %131 = arith.maximumf %129, %130 : vector<16x64xf32>
    %132 = vector.extract_strided_slice %19 {offsets = [32, 0], sizes = [64, 32], strides = [1, 1]} : vector<96x32xbf16> to vector<64x32xbf16>
    %133 = arith.truncf %131 : vector<16x64xf32> to vector<16x64xbf16>
    %cst_48 = arith.constant dense<0.000000e+00> : vector<16x32xf32>
    %134 = tpu.matmul %133, %132, %cst_48 {dimension_numbers = #tpu.dot_dimension_numbers<[1], [0], [0], [1], [0, 0, 1, 1], [], []>} : vector<16x64xbf16>, vector<64x32xbf16>, vector<16x32xf32> -> vector<16x32xf32>
    %135 = arith.addf %112, %134 : vector<16x32xf32>
    %c2_49 = arith.constant 2 : index
    %c0_50 = arith.constant 0 : index
    %136 = vector.load %arg2[%c2_49, %c0_50] : memref<5x32xf32, #tpu.memory_space<vmem>>, vector<1x32xf32>
    %137 = arith.mulf %135, %135 : vector<16x32xf32>
    %cst_51 = arith.constant dense<0.000000e+00> : vector<16xf32>
    %138 = vector.multi_reduction <add>, %137, %cst_51 [1] : vector<16x32xf32> to vector<16xf32>
    %139 = vector.shape_cast %138 : vector<16xf32> to vector<16x1xf32>
    %cst_52 = arith.constant 3.200000e+01 : f32
    %140 = vector.broadcast %cst_52 : f32 to vector<16x1xf32>
    %141 = arith.divf %139, %140 : vector<16x1xf32>
    %cst_53 = arith.constant 9.99999997E-7 : f32
    %142 = vector.broadcast %cst_53 : f32 to vector<16x1xf32>
    %143 = arith.addf %141, %142 : vector<16x1xf32>
    %144 = math.rsqrt %143 : vector<16x1xf32>
    %145 = vector.broadcast %144 : vector<16x1xf32> to vector<16x32xf32>
    %146 = arith.mulf %135, %145 : vector<16x32xf32>
    %147 = vector.broadcast %136 : vector<1x32xf32> to vector<16x32xf32>
    %148 = arith.mulf %146, %147 : vector<16x32xf32>
    %149 = arith.truncf %148 : vector<16x32xf32> to vector<16x32xbf16>
    %c1_54 = arith.constant 1 : index
    %c0_55 = arith.constant 0 : index
    %c0_56 = arith.constant 0 : index
    %150 = vector.load %arg3[%c1_54, %c0_55, %c0_56] : memref<2x32x96xbf16, #tpu.memory_space<vmem>>, vector<1x32x96xbf16>
    %151 = vector.shape_cast %150 : vector<1x32x96xbf16> to vector<32x96xbf16>
    %cst_57 = arith.constant dense<0.000000e+00> : vector<16x96xf32>
    %152 = tpu.matmul %149, %151, %cst_57 {dimension_numbers = #tpu.dot_dimension_numbers<[1], [0], [0], [1], [0, 0, 1, 1], [], []>} : vector<16x32xbf16>, vector<32x96xbf16>, vector<16x96xf32> -> vector<16x96xf32>
    %c1_58 = arith.constant 1 : index
    %c0_59 = arith.constant 0 : index
    %c0_60 = arith.constant 0 : index
    %153 = vector.load %arg5[%c1_58, %c0_59, %c0_60] : memref<2x96x32xbf16, #tpu.memory_space<vmem>>, vector<1x96x32xbf16>
    %154 = vector.shape_cast %153 : vector<1x96x32xbf16> to vector<96x32xbf16>
    %155 = vector.extract_strided_slice %152 {offsets = [0, 0], sizes = [16, 8], strides = [1, 1]} : vector<16x96xf32> to vector<16x8xf32>
    %156 = vector.extract_strided_slice %152 {offsets = [0, 32], sizes = [16, 8], strides = [1, 1]} : vector<16x96xf32> to vector<16x8xf32>
    %157 = vector.extract_strided_slice %152 {offsets = [0, 64], sizes = [16, 8], strides = [1, 1]} : vector<16x96xf32> to vector<16x8xf32>
    %158 = arith.truncf %155 : vector<16x8xf32> to vector<16x8xbf16>
    %159 = arith.truncf %156 : vector<16x8xf32> to vector<16x8xbf16>
    %cst_61 = arith.constant dense<0.000000e+00> : vector<16x16xf32>
    %160 = tpu.matmul %158, %159, %cst_61 {dimension_numbers = #tpu.dot_dimension_numbers<[1], [1], [0], [0], [0, 0, 1, 0], [], []>} : vector<16x8xbf16>, vector<16x8xbf16>, vector<16x16xf32> -> vector<16x16xf32>
    %c0_62 = arith.constant 0 : index
    %c0_63 = arith.constant 0 : index
    %c0_64 = arith.constant 0 : index
    %161 = vector.load %arg1[%c0_62, %c0_63, %c0_64] : memref<4x16x16xf32, #tpu.memory_space<vmem>>, vector<1x16x16xf32>
    %162 = vector.shape_cast %161 : vector<1x16x16xf32> to vector<16x16xf32>
    %163 = arith.addf %160, %162 : vector<16x16xf32>
    %cst_65 = arith.constant dense<0xFF800000> : vector<16xf32>
    %164 = vector.multi_reduction <maximumf>, %163, %cst_65 [1] : vector<16x16xf32> to vector<16xf32>
    %165 = vector.shape_cast %164 : vector<16xf32> to vector<16x1xf32>
    %166 = vector.broadcast %165 : vector<16x1xf32> to vector<16x16xf32>
    %167 = arith.subf %163, %166 : vector<16x16xf32>
    %168 = math.exp %167 : vector<16x16xf32>
    %cst_66 = arith.constant dense<0.000000e+00> : vector<16xf32>
    %169 = vector.multi_reduction <add>, %168, %cst_66 [1] : vector<16x16xf32> to vector<16xf32>
    %170 = vector.shape_cast %169 : vector<16xf32> to vector<16x1xf32>
    %171 = tpu.reciprocal %170 {approx = true} : vector<16x1xf32> -> vector<16x1xf32>
    %172 = vector.broadcast %171 : vector<16x1xf32> to vector<16x16xf32>
    %173 = arith.mulf %168, %172 : vector<16x16xf32>
    %174 = arith.truncf %173 : vector<16x16xf32> to vector<16x16xbf16>
    %175 = arith.truncf %157 : vector<16x8xf32> to vector<16x8xbf16>
    %cst_67 = arith.constant dense<0.000000e+00> : vector<16x8xf32>
    %176 = tpu.matmul %174, %175, %cst_67 {dimension_numbers = #tpu.dot_dimension_numbers<[1], [0], [0], [1], [0, 0, 1, 1], [], []>} : vector<16x16xbf16>, vector<16x8xbf16>, vector<16x8xf32> -> vector<16x8xf32>
    %177 = vector.extract_strided_slice %152 {offsets = [0, 8], sizes = [16, 8], strides = [1, 1]} : vector<16x96xf32> to vector<16x8xf32>
    %178 = vector.extract_strided_slice %152 {offsets = [0, 40], sizes = [16, 8], strides = [1, 1]} : vector<16x96xf32> to vector<16x8xf32>
    %179 = vector.extract_strided_slice %152 {offsets = [0, 72], sizes = [16, 8], strides = [1, 1]} : vector<16x96xf32> to vector<16x8xf32>
    %180 = arith.truncf %177 : vector<16x8xf32> to vector<16x8xbf16>
    %181 = arith.truncf %178 : vector<16x8xf32> to vector<16x8xbf16>
    %cst_68 = arith.constant dense<0.000000e+00> : vector<16x16xf32>
    %182 = tpu.matmul %180, %181, %cst_68 {dimension_numbers = #tpu.dot_dimension_numbers<[1], [1], [0], [0], [0, 0, 1, 0], [], []>} : vector<16x8xbf16>, vector<16x8xbf16>, vector<16x16xf32> -> vector<16x16xf32>
    %c1_69 = arith.constant 1 : index
    %c0_70 = arith.constant 0 : index
    %c0_71 = arith.constant 0 : index
    %183 = vector.load %arg1[%c1_69, %c0_70, %c0_71] : memref<4x16x16xf32, #tpu.memory_space<vmem>>, vector<1x16x16xf32>
    %184 = vector.shape_cast %183 : vector<1x16x16xf32> to vector<16x16xf32>
    %185 = arith.addf %182, %184 : vector<16x16xf32>
    %cst_72 = arith.constant dense<0xFF800000> : vector<16xf32>
    %186 = vector.multi_reduction <maximumf>, %185, %cst_72 [1] : vector<16x16xf32> to vector<16xf32>
    %187 = vector.shape_cast %186 : vector<16xf32> to vector<16x1xf32>
    %188 = vector.broadcast %187 : vector<16x1xf32> to vector<16x16xf32>
    %189 = arith.subf %185, %188 : vector<16x16xf32>
    %190 = math.exp %189 : vector<16x16xf32>
    %cst_73 = arith.constant dense<0.000000e+00> : vector<16xf32>
    %191 = vector.multi_reduction <add>, %190, %cst_73 [1] : vector<16x16xf32> to vector<16xf32>
    %192 = vector.shape_cast %191 : vector<16xf32> to vector<16x1xf32>
    %193 = tpu.reciprocal %192 {approx = true} : vector<16x1xf32> -> vector<16x1xf32>
    %194 = vector.broadcast %193 : vector<16x1xf32> to vector<16x16xf32>
    %195 = arith.mulf %190, %194 : vector<16x16xf32>
    %196 = arith.truncf %195 : vector<16x16xf32> to vector<16x16xbf16>
    %197 = arith.truncf %179 : vector<16x8xf32> to vector<16x8xbf16>
    %cst_74 = arith.constant dense<0.000000e+00> : vector<16x8xf32>
    %198 = tpu.matmul %196, %197, %cst_74 {dimension_numbers = #tpu.dot_dimension_numbers<[1], [0], [0], [1], [0, 0, 1, 1], [], []>} : vector<16x16xbf16>, vector<16x8xbf16>, vector<16x8xf32> -> vector<16x8xf32>
    %199 = vector.extract_strided_slice %152 {offsets = [0, 16], sizes = [16, 8], strides = [1, 1]} : vector<16x96xf32> to vector<16x8xf32>
    %200 = vector.extract_strided_slice %152 {offsets = [0, 48], sizes = [16, 8], strides = [1, 1]} : vector<16x96xf32> to vector<16x8xf32>
    %201 = vector.extract_strided_slice %152 {offsets = [0, 80], sizes = [16, 8], strides = [1, 1]} : vector<16x96xf32> to vector<16x8xf32>
    %202 = arith.truncf %199 : vector<16x8xf32> to vector<16x8xbf16>
    %203 = arith.truncf %200 : vector<16x8xf32> to vector<16x8xbf16>
    %cst_75 = arith.constant dense<0.000000e+00> : vector<16x16xf32>
    %204 = tpu.matmul %202, %203, %cst_75 {dimension_numbers = #tpu.dot_dimension_numbers<[1], [1], [0], [0], [0, 0, 1, 0], [], []>} : vector<16x8xbf16>, vector<16x8xbf16>, vector<16x16xf32> -> vector<16x16xf32>
    %c2_76 = arith.constant 2 : index
    %c0_77 = arith.constant 0 : index
    %c0_78 = arith.constant 0 : index
    %205 = vector.load %arg1[%c2_76, %c0_77, %c0_78] : memref<4x16x16xf32, #tpu.memory_space<vmem>>, vector<1x16x16xf32>
    %206 = vector.shape_cast %205 : vector<1x16x16xf32> to vector<16x16xf32>
    %207 = arith.addf %204, %206 : vector<16x16xf32>
    %cst_79 = arith.constant dense<0xFF800000> : vector<16xf32>
    %208 = vector.multi_reduction <maximumf>, %207, %cst_79 [1] : vector<16x16xf32> to vector<16xf32>
    %209 = vector.shape_cast %208 : vector<16xf32> to vector<16x1xf32>
    %210 = vector.broadcast %209 : vector<16x1xf32> to vector<16x16xf32>
    %211 = arith.subf %207, %210 : vector<16x16xf32>
    %212 = math.exp %211 : vector<16x16xf32>
    %cst_80 = arith.constant dense<0.000000e+00> : vector<16xf32>
    %213 = vector.multi_reduction <add>, %212, %cst_80 [1] : vector<16x16xf32> to vector<16xf32>
    %214 = vector.shape_cast %213 : vector<16xf32> to vector<16x1xf32>
    %215 = tpu.reciprocal %214 {approx = true} : vector<16x1xf32> -> vector<16x1xf32>
    %216 = vector.broadcast %215 : vector<16x1xf32> to vector<16x16xf32>
    %217 = arith.mulf %212, %216 : vector<16x16xf32>
    %218 = arith.truncf %217 : vector<16x16xf32> to vector<16x16xbf16>
    %219 = arith.truncf %201 : vector<16x8xf32> to vector<16x8xbf16>
    %cst_81 = arith.constant dense<0.000000e+00> : vector<16x8xf32>
    %220 = tpu.matmul %218, %219, %cst_81 {dimension_numbers = #tpu.dot_dimension_numbers<[1], [0], [0], [1], [0, 0, 1, 1], [], []>} : vector<16x16xbf16>, vector<16x8xbf16>, vector<16x8xf32> -> vector<16x8xf32>
    %221 = vector.extract_strided_slice %152 {offsets = [0, 24], sizes = [16, 8], strides = [1, 1]} : vector<16x96xf32> to vector<16x8xf32>
    %222 = vector.extract_strided_slice %152 {offsets = [0, 56], sizes = [16, 8], strides = [1, 1]} : vector<16x96xf32> to vector<16x8xf32>
    %223 = vector.extract_strided_slice %152 {offsets = [0, 88], sizes = [16, 8], strides = [1, 1]} : vector<16x96xf32> to vector<16x8xf32>
    %224 = arith.truncf %221 : vector<16x8xf32> to vector<16x8xbf16>
    %225 = arith.truncf %222 : vector<16x8xf32> to vector<16x8xbf16>
    %cst_82 = arith.constant dense<0.000000e+00> : vector<16x16xf32>
    %226 = tpu.matmul %224, %225, %cst_82 {dimension_numbers = #tpu.dot_dimension_numbers<[1], [1], [0], [0], [0, 0, 1, 0], [], []>} : vector<16x8xbf16>, vector<16x8xbf16>, vector<16x16xf32> -> vector<16x16xf32>
    %c3_83 = arith.constant 3 : index
    %c0_84 = arith.constant 0 : index
    %c0_85 = arith.constant 0 : index
    %227 = vector.load %arg1[%c3_83, %c0_84, %c0_85] : memref<4x16x16xf32, #tpu.memory_space<vmem>>, vector<1x16x16xf32>
    %228 = vector.shape_cast %227 : vector<1x16x16xf32> to vector<16x16xf32>
    %229 = arith.addf %226, %228 : vector<16x16xf32>
    %cst_86 = arith.constant dense<0xFF800000> : vector<16xf32>
    %230 = vector.multi_reduction <maximumf>, %229, %cst_86 [1] : vector<16x16xf32> to vector<16xf32>
    %231 = vector.shape_cast %230 : vector<16xf32> to vector<16x1xf32>
    %232 = vector.broadcast %231 : vector<16x1xf32> to vector<16x16xf32>
    %233 = arith.subf %229, %232 : vector<16x16xf32>
    %234 = math.exp %233 : vector<16x16xf32>
    %cst_87 = arith.constant dense<0.000000e+00> : vector<16xf32>
    %235 = vector.multi_reduction <add>, %234, %cst_87 [1] : vector<16x16xf32> to vector<16xf32>
    %236 = vector.shape_cast %235 : vector<16xf32> to vector<16x1xf32>
    %237 = tpu.reciprocal %236 {approx = true} : vector<16x1xf32> -> vector<16x1xf32>
    %238 = vector.broadcast %237 : vector<16x1xf32> to vector<16x16xf32>
    %239 = arith.mulf %234, %238 : vector<16x16xf32>
    %240 = arith.truncf %239 : vector<16x16xf32> to vector<16x16xbf16>
    %241 = arith.truncf %223 : vector<16x8xf32> to vector<16x8xbf16>
    %cst_88 = arith.constant dense<0.000000e+00> : vector<16x8xf32>
    %242 = tpu.matmul %240, %241, %cst_88 {dimension_numbers = #tpu.dot_dimension_numbers<[1], [0], [0], [1], [0, 0, 1, 1], [], []>} : vector<16x16xbf16>, vector<16x8xbf16>, vector<16x8xf32> -> vector<16x8xf32>
    %243 = tpu.concatenate %176, %198, %220, %242 in 1 : vector<16x8xf32>, vector<16x8xf32>, vector<16x8xf32>, vector<16x8xf32> -> vector<16x32xf32>
    %244 = vector.extract_strided_slice %154 {offsets = [0, 0], sizes = [32, 32], strides = [1, 1]} : vector<96x32xbf16> to vector<32x32xbf16>
    %245 = arith.truncf %243 : vector<16x32xf32> to vector<16x32xbf16>
    %cst_89 = arith.constant dense<0.000000e+00> : vector<16x32xf32>
    %246 = tpu.matmul %245, %244, %cst_89 {dimension_numbers = #tpu.dot_dimension_numbers<[1], [0], [0], [1], [0, 0, 1, 1], [], []>} : vector<16x32xbf16>, vector<32x32xbf16>, vector<16x32xf32> -> vector<16x32xf32>
    %247 = arith.addf %135, %246 : vector<16x32xf32>
    %c3_90 = arith.constant 3 : index
    %c0_91 = arith.constant 0 : index
    %248 = vector.load %arg2[%c3_90, %c0_91] : memref<5x32xf32, #tpu.memory_space<vmem>>, vector<1x32xf32>
    %249 = arith.mulf %247, %247 : vector<16x32xf32>
    %cst_92 = arith.constant dense<0.000000e+00> : vector<16xf32>
    %250 = vector.multi_reduction <add>, %249, %cst_92 [1] : vector<16x32xf32> to vector<16xf32>
    %251 = vector.shape_cast %250 : vector<16xf32> to vector<16x1xf32>
    %cst_93 = arith.constant 3.200000e+01 : f32
    %252 = vector.broadcast %cst_93 : f32 to vector<16x1xf32>
    %253 = arith.divf %251, %252 : vector<16x1xf32>
    %cst_94 = arith.constant 9.99999997E-7 : f32
    %254 = vector.broadcast %cst_94 : f32 to vector<16x1xf32>
    %255 = arith.addf %253, %254 : vector<16x1xf32>
    %256 = math.rsqrt %255 : vector<16x1xf32>
    %257 = vector.broadcast %256 : vector<16x1xf32> to vector<16x32xf32>
    %258 = arith.mulf %247, %257 : vector<16x32xf32>
    %259 = vector.broadcast %248 : vector<1x32xf32> to vector<16x32xf32>
    %260 = arith.mulf %258, %259 : vector<16x32xf32>
    %261 = arith.truncf %260 : vector<16x32xf32> to vector<16x32xbf16>
    %c1_95 = arith.constant 1 : index
    %c0_96 = arith.constant 0 : index
    %c0_97 = arith.constant 0 : index
    %262 = vector.load %arg4[%c1_95, %c0_96, %c0_97] : memref<2x32x64xbf16, #tpu.memory_space<vmem>>, vector<1x32x64xbf16>
    %263 = vector.shape_cast %262 : vector<1x32x64xbf16> to vector<32x64xbf16>
    %cst_98 = arith.constant dense<0.000000e+00> : vector<16x64xf32>
    %264 = tpu.matmul %261, %263, %cst_98 {dimension_numbers = #tpu.dot_dimension_numbers<[1], [0], [0], [1], [0, 0, 1, 1], [], []>} : vector<16x32xbf16>, vector<32x64xbf16>, vector<16x64xf32> -> vector<16x64xf32>
    %cst_99 = arith.constant 0.000000e+00 : f32
    %265 = vector.broadcast %cst_99 : f32 to vector<16x64xf32>
    %266 = arith.maximumf %264, %265 : vector<16x64xf32>
    %267 = vector.extract_strided_slice %154 {offsets = [32, 0], sizes = [64, 32], strides = [1, 1]} : vector<96x32xbf16> to vector<64x32xbf16>
    %268 = arith.truncf %266 : vector<16x64xf32> to vector<16x64xbf16>
    %cst_100 = arith.constant dense<0.000000e+00> : vector<16x32xf32>
    %269 = tpu.matmul %268, %267, %cst_100 {dimension_numbers = #tpu.dot_dimension_numbers<[1], [0], [0], [1], [0, 0, 1, 1], [], []>} : vector<16x64xbf16>, vector<64x32xbf16>, vector<16x32xf32> -> vector<16x32xf32>
    %270 = arith.addf %247, %269 : vector<16x32xf32>
    %c4 = arith.constant 4 : index
    %c0_101 = arith.constant 0 : index
    %271 = vector.load %arg2[%c4, %c0_101] : memref<5x32xf32, #tpu.memory_space<vmem>>, vector<1x32xf32>
    %272 = arith.mulf %270, %270 : vector<16x32xf32>
    %cst_102 = arith.constant dense<0.000000e+00> : vector<16xf32>
    %273 = vector.multi_reduction <add>, %272, %cst_102 [1] : vector<16x32xf32> to vector<16xf32>
    %274 = vector.shape_cast %273 : vector<16xf32> to vector<16x1xf32>
    %cst_103 = arith.constant 3.200000e+01 : f32
    %275 = vector.broadcast %cst_103 : f32 to vector<16x1xf32>
    %276 = arith.divf %274, %275 : vector<16x1xf32>
    %cst_104 = arith.constant 9.99999997E-7 : f32
    %277 = vector.broadcast %cst_104 : f32 to vector<16x1xf32>
    %278 = arith.addf %276, %277 : vector<16x1xf32>
    %279 = math.rsqrt %278 : vector<16x1xf32>
    %280 = vector.broadcast %279 : vector<16x1xf32> to vector<16x32xf32>
    %281 = arith.mulf %270, %280 : vector<16x32xf32>
    %282 = vector.broadcast %271 : vector<1x32xf32> to vector<16x32xf32>
    %283 = arith.mulf %281, %282 : vector<16x32xf32>
    %284 = vector.extract_strided_slice %283 {offsets = [0, 0], sizes = [8, 32], strides = [1, 1]} : vector<16x32xf32> to vector<8x32xf32>
    %cst_105 = arith.constant dense<0.000000e+00> : vector<32xf32>
    %285 = vector.multi_reduction <add>, %284, %cst_105 [0] : vector<8x32xf32> to vector<32xf32>
    %286 = vector.shape_cast %285 : vector<32xf32> to vector<1x32xf32>
    %287 = vector.extract_strided_slice %283 {offsets = [8, 0], sizes = [8, 32], strides = [1, 1]} : vector<16x32xf32> to vector<8x32xf32>
    %cst_106 = arith.constant dense<0.000000e+00> : vector<32xf32>
    %288 = vector.multi_reduction <add>, %287, %cst_106 [0] : vector<8x32xf32> to vector<32xf32>
    %289 = vector.shape_cast %288 : vector<32xf32> to vector<1x32xf32>
    %290 = tpu.concatenate %286, %289 in 0 : vector<1x32xf32>, vector<1x32xf32> -> vector<2x32xf32>
    %cst_107 = arith.constant 1.250000e-01 : f32
    %291 = vector.broadcast %cst_107 : f32 to vector<2x32xf32>
    %292 = arith.mulf %290, %291 : vector<2x32xf32>
    %c0_108 = arith.constant 0 : index
    %c0_109 = arith.constant 0 : index
    %293 = vector.load %arg6[%c0_108, %c0_109] : memref<33x2xf32, #tpu.memory_space<vmem>>, vector<32x2xf32>
    %c32 = arith.constant 32 : index
    %c0_110 = arith.constant 0 : index
    %294 = vector.load %arg6[%c32, %c0_110] : memref<33x2xf32, #tpu.memory_space<vmem>>, vector<1x2xf32>
    %295 = arith.truncf %292 : vector<2x32xf32> to vector<2x32xbf16>
    %296 = arith.truncf %293 : vector<32x2xf32> to vector<32x2xbf16>
    %cst_111 = arith.constant dense<0.000000e+00> : vector<2x2xf32>
    %297 = tpu.matmul %295, %296, %cst_111 {dimension_numbers = #tpu.dot_dimension_numbers<[1], [0], [0], [1], [0, 0, 1, 1], [], []>} : vector<2x32xbf16>, vector<32x2xbf16>, vector<2x2xf32> -> vector<2x2xf32>
    %298 = vector.broadcast %294 : vector<1x2xf32> to vector<2x2xf32>
    %299 = arith.addf %297, %298 : vector<2x2xf32>
    %c0_112 = arith.constant 0 : index
    %c0_113 = arith.constant 0 : index
    %300 = vector.load %arg7[%c0_112, %c0_113] : memref<2x2xf32, #tpu.memory_space<vmem>>, vector<2x2xf32>
    tpu.vector_store %arg7[%c0_112, %c0_113], %299 {strides = array<i32>} : memref<2x2xf32, #tpu.memory_space<vmem>>, vector<2x2xf32>,
    return
  }
}

</mosaic_0001>

<llo_original>
// kernel: tile.9
$region0: #{tile.9}
  %s0 = inlined_call_operand.vmem [shape: f32[4,2,8,2,8], index: 0, kind: input, shape index: {}]
  %s1 = inlined_call_operand.vmem [shape: f32[4,16,16], index: 1, kind: output, shape index: {}]
  $region1: #{tile.9} parent=0
    #allocation0 [shape = 'u8[262144]{0}', space=vmem, size = 0x40000, scoped, tag = 'scoped mem for input reshape']
    %s3 = ssub.s32 4, 1
    %s4 = scalar_lea.vmem %s0, 126
    %v5 = vld [vmem:[%s4] sm:%s3]
    %s6 = scalar_lea.vmem [#allocation0], 504
    %7 = vst [vmem:[%s6] sm:%s3] %v5
    %s8 = scalar_lea.vmem %s0, 124
    %v9 = vld [vmem:[%s8] sm:%s3]
    %s10 = scalar_lea.vmem [#allocation0], 496
    %11 = vst [vmem:[%s10] sm:%s3] %v9
    %s12 = scalar_lea.vmem %s0, 122
    %v13 = vld [vmem:[%s12] sm:%s3]
    %s14 = scalar_lea.vmem [#allocation0], 488
    %15 = vst [vmem:[%s14] sm:%s3] %v13
    %s16 = scalar_lea.vmem %s0, 120
    %v17 = vld [vmem:[%s16] sm:%s3]
    %s18 = scalar_lea.vmem [#allocation0], 480
    %19 = vst [vmem:[%s18] sm:%s3] %v17
    %s20 = scalar_lea.vmem %s0, 118
    %v21 = vld [vmem:[%s20] sm:%s3]
    %s22 = scalar_lea.vmem [#allocation0], 472
    %23 = vst [vmem:[%s22] sm:%s3] %v21
    %s24 = scalar_lea.vmem %s0, 116
    %v25 = vld [vmem:[%s24] sm:%s3]
    %s26 = scalar_lea.vmem [#allocation0], 464
    %27 = vst [vmem:[%s26] sm:%s3] %v25
    %s28 = scalar_lea.vmem %s0, 114
    %v29 = vld [vmem:[%s28] sm:%s3]
    %s30 = scalar_lea.vmem [#allocation0], 456
    %31 = vst [vmem:[%s30] sm:%s3] %v29
    %s32 = scalar_lea.vmem %s0, 112
    %v33 = vld [vmem:[%s32] sm:%s3]
    %s34 = scalar_lea.vmem [#allocation0], 448
    %35 = vst [vmem:[%s34] sm:%s3] %v33
    %s36 = scalar_lea.vmem %s0, 110
    %v37 = vld [vmem:[%s36] sm:%s3]
    %s38 = scalar_lea.vmem [#allocation0], 440
    %39 = vst [vmem:[%s38] sm:%s3] %v37
    %s40 = scalar_lea.vmem %s0, 108
    %v41 = vld [vmem:[%s40] sm:%s3]
    %s42 = scalar_lea.vmem [#allocation0], 432
    %43 = vst [vmem:[%s42] sm:%s3] %v41
    %s44 = scalar_lea.vmem %s0, 106
    %v45 = vld [vmem:[%s44] sm:%s3]
    %s46 = scalar_lea.vmem [#allocation0], 424
    %47 = vst [vmem:[%s46] sm:%s3] %v45
    %s48 = scalar_lea.vmem %s0, 104
    %v49 = vld [vmem:[%s48] sm:%s3]
    %s50 = scalar_lea.vmem [#allocation0], 416
    %51 = vst [vmem:[%s50] sm:%s3] %v49
    %s52 = scalar_lea.vmem %s0, 102
    %v53 = vld [vmem:[%s52] sm:%s3]
    %s54 = scalar_lea.vmem [#allocation0], 408
    %55 = vst [vmem:[%s54] sm:%s3] %v53
    %s56 = scalar_lea.vmem %s0, 100
    %v57 = vld [vmem:[%s56] sm:%s3]
    %s58 = scalar_lea.vmem [#allocation0], 400
    %59 = vst [vmem:[%s58] sm:%s3] %v57
    %s60 = scalar_lea.vmem %s0, 98
    %v61 = vld [vmem:[%s60] sm:%s3]
    %s62 = scalar_lea.vmem [#allocation0], 392
    %63 = vst [vmem:[%s62] sm:%s3] %v61
    %s64 = scalar_lea.vmem %s0, 96
    %v65 = vld [vmem:[%s64] sm:%s3]
    %s66 = scalar_lea.vmem [#allocation0], 384
    %67 = vst [vmem:[%s66] sm:%s3] %v65
    %s68 = scalar_lea.vmem %s0, 94
    %v69 = vld [vmem:[%s68] sm:%s3]
    %s70 = scalar_lea.vmem [#allocation0], 376
    %71 = vst [vmem:[%s70] sm:%s3] %v69
    %s72 = scalar_lea.vmem %s0, 92
    %v73 = vld [vmem:[%s72] sm:%s3]
    %s74 = scalar_lea.vmem [#allocation0], 368
    %75 = vst [vmem:[%s74] sm:%s3] %v73
    %s76 = scalar_lea.vmem %s0, 90
    %v77 = vld [vmem:[%s76] sm:%s3]
    %s78 = scalar_lea.vmem [#allocation0], 360
    %79 = vst [vmem:[%s78] sm:%s3] %v77
    %s80 = scalar_lea.vmem %s0, 88
    %v81 = vld [vmem:[%s80] sm:%s3]
    %s82 = scalar_lea.vmem [#allocation0], 352
    %83 = vst [vmem:[%s82] sm:%s3] %v81
    %s84 = scalar_lea.vmem %s0, 86
    %v85 = vld [vmem:[%s84] sm:%s3]
    %s86 = scalar_lea.vmem [#allocation0], 344
    %87 = vst [vmem:[%s86] sm:%s3] %v85
    %s88 = scalar_lea.vmem %s0, 84
    %v89 = vld [vmem:[%s88] sm:%s3]
    %s90 = scalar_lea.vmem [#allocation0], 336
    %91 = vst [vmem:[%s90] sm:%s3] %v89
    %s92 = scalar_lea.vmem %s0, 82
    %v93 = vld [vmem:[%s92] sm:%s3]
    %s94 = scalar_lea.vmem [#allocation0], 328
    %95 = vst [vmem:[%s94] sm:%s3] %v93
    %s96 = scalar_lea.vmem %s0, 80
    %v97 = vld [vmem:[%s96] sm:%s3]
    %s98 = scalar_lea.vmem [#allocation0], 320
    %99 = vst [vmem:[%s98] sm:%s3] %v97
    %s100 = scalar_lea.vmem %s0, 78
    %v101 = vld [vmem:[%s100] sm:%s3]
    %s102 = scalar_lea.vmem [#allocation0], 312
    %103 = vst [vmem:[%s102] sm:%s3] %v101
    %s104 = scalar_lea.vmem %s0, 76
    %v105 = vld [vmem:[%s104] sm:%s3]
    %s106 = scalar_lea.vmem [#allocation0], 304
    %107 = vst [vmem:[%s106] sm:%s3] %v105
    %s108 = scalar_lea.vmem %s0, 74
    %v109 = vld [vmem:[%s108] sm:%s3]
    %s110 = scalar_lea.vmem [#allocation0], 296
    %111 = vst [vmem:[%s110] sm:%s3] %v109
    %s112 = scalar_lea.vmem %s0, 72
    %v113 = vld [vmem:[%s112] sm:%s3]
    %s114 = scalar_lea.vmem [#allocation0], 288
    %115 = vst [vmem:[%s114] sm:%s3] %v113
    %s116 = scalar_lea.vmem %s0, 70
    %v117 = vld [vmem:[%s116] sm:%s3]
    %s118 = scalar_lea.vmem [#allocation0], 280
    %119 = vst [vmem:[%s118] sm:%s3] %v117
    %s120 = scalar_lea.vmem %s0, 68
    %v121 = vld [vmem:[%s120] sm:%s3]
    %s122 = scalar_lea.vmem [#allocation0], 272
    %123 = vst [vmem:[%s122] sm:%s3] %v121
    %s124 = scalar_lea.vmem %s0, 66
    %v125 = vld [vmem:[%s124] sm:%s3]
    %s126 = scalar_lea.vmem [#allocation0], 264
    %127 = vst [vmem:[%s126] sm:%s3] %v125
    %s128 = scalar_lea.vmem %s0, 64
    %v129 = vld [vmem:[%s128] sm:%s3]
    %s130 = scalar_lea.vmem [#allocation0], 256
    %131 = vst [vmem:[%s130] sm:%s3] %v129
    %s132 = scalar_lea.vmem %s0, 62
    %v133 = vld [vmem:[%s132] sm:%s3]
    %s134 = scalar_lea.vmem [#allocation0], 248
    %135 = vst [vmem:[%s134] sm:%s3] %v133
    %s136 = scalar_lea.vmem %s0, 60
    %v137 = vld [vmem:[%s136] sm:%s3]
    %s138 = scalar_lea.vmem [#allocation0], 240
    %139 = vst [vmem:[%s138] sm:%s3] %v137
    %s140 = scalar_lea.vmem %s0, 58
    %v141 = vld [vmem:[%s140] sm:%s3]
    %s142 = scalar_lea.vmem [#allocation0], 232
    %143 = vst [vmem:[%s142] sm:%s3] %v141
    %s144 = scalar_lea.vmem %s0, 56
    %v145 = vld [vmem:[%s144] sm:%s3]
    %s146 = scalar_lea.vmem [#allocation0], 224
    %147 = vst [vmem:[%s146] sm:%s3] %v145
    %s148 = scalar_lea.vmem %s0, 54
    %v149 = vld [vmem:[%s148] sm:%s3]
    %s150 = scalar_lea.vmem [#allocation0], 216
    %151 = vst [vmem:[%s150] sm:%s3] %v149
    %s152 = scalar_lea.vmem %s0, 52
    %v153 = vld [vmem:[%s152] sm:%s3]
    %s154 = scalar_lea.vmem [#allocation0], 208
    %155 = vst [vmem:[%s154] sm:%s3] %v153
    %s156 = scalar_lea.vmem %s0, 50
    %v157 = vld [vmem:[%s156] sm:%s3]
    %s158 = scalar_lea.vmem [#allocation0], 200
    %159 = vst [vmem:[%s158] sm:%s3] %v157
    %s160 = scalar_lea.vmem %s0, 48
    %v161 = vld [vmem:[%s160] sm:%s3]
    %s162 = scalar_lea.vmem [#allocation0], 192
    %163 = vst [vmem:[%s162] sm:%s3] %v161
    %s164 = scalar_lea.vmem %s0, 46
    %v165 = vld [vmem:[%s164] sm:%s3]
    %s166 = scalar_lea.vmem [#allocation0], 184
    %167 = vst [vmem:[%s166] sm:%s3] %v165
    %s168 = scalar_lea.vmem %s0, 44
    %v169 = vld [vmem:[%s168] sm:%s3]
    %s170 = scalar_lea.vmem [#allocation0], 176
    %171 = vst [vmem:[%s170] sm:%s3] %v169
    %s172 = scalar_lea.vmem %s0, 42
    %v173 = vld [vmem:[%s172] sm:%s3]
    %s174 = scalar_lea.vmem [#allocation0], 168
    %175 = vst [vmem:[%s174] sm:%s3] %v173
    %s176 = scalar_lea.vmem %s0, 40
    %v177 = vld [vmem:[%s176] sm:%s3]
    %s178 = scalar_lea.vmem [#allocation0], 160
    %179 = vst [vmem:[%s178] sm:%s3] %v177
    %s180 = scalar_lea.vmem %s0, 38
    %v181 = vld [vmem:[%s180] sm:%s3]
    %s182 = scalar_lea.vmem [#allocation0], 152
    %183 = vst [vmem:[%s182] sm:%s3] %v181
    %s184 = scalar_lea.vmem %s0, 36
    %v185 = vld [vmem:[%s184] sm:%s3]
    %s186 = scalar_lea.vmem [#allocation0], 144
    %187 = vst [vmem:[%s186] sm:%s3] %v185
    %s188 = scalar_lea.vmem %s0, 34
    %v189 = vld [vmem:[%s188] sm:%s3]
    %s190 = scalar_lea.vmem [#allocation0], 136
    %191 = vst [vmem:[%s190] sm:%s3] %v189
    %s192 = scalar_lea.vmem %s0, 32
    %v193 = vld [vmem:[%s192] sm:%s3]
    %s194 = scalar_lea.vmem [#allocation0], 128
    %195 = vst [vmem:[%s194] sm:%s3] %v193
    %s196 = scalar_lea.vmem %s0, 30
    %v197 = vld [vmem:[%s196] sm:%s3]
    %s198 = scalar_lea.vmem [#allocation0], 120
    %199 = vst [vmem:[%s198] sm:%s3] %v197
    %s200 = scalar_lea.vmem %s0, 28
    %v201 = vld [vmem:[%s200] sm:%s3]
    %s202 = scalar_lea.vmem [#allocation0], 112
    %203 = vst [vmem:[%s202] sm:%s3] %v201
    %s204 = scalar_lea.vmem %s0, 26
    %v205 = vld [vmem:[%s204] sm:%s3]
    %s206 = scalar_lea.vmem [#allocation0], 104
    %207 = vst [vmem:[%s206] sm:%s3] %v205
    %s208 = scalar_lea.vmem %s0, 24
    %v209 = vld [vmem:[%s208] sm:%s3]
    %s210 = scalar_lea.vmem [#allocation0], 96
    %211 = vst [vmem:[%s210] sm:%s3] %v209
    %s212 = scalar_lea.vmem %s0, 22
    %v213 = vld [vmem:[%s212] sm:%s3]
    %s214 = scalar_lea.vmem [#allocation0], 88
    %215 = vst [vmem:[%s214] sm:%s3] %v213
    %s216 = scalar_lea.vmem %s0, 20
    %v217 = vld [vmem:[%s216] sm:%s3]
    %s218 = scalar_lea.vmem [#allocation0], 80
    %219 = vst [vmem:[%s218] sm:%s3] %v217
    %s220 = scalar_lea.vmem %s0, 18
    %v221 = vld [vmem:[%s220] sm:%s3]
    %s222 = scalar_lea.vmem [#allocation0], 72
    %223 = vst [vmem:[%s222] sm:%s3] %v221
    %s224 = scalar_lea.vmem %s0, 16
    %v225 = vld [vmem:[%s224] sm:%s3]
    %s226 = scalar_lea.vmem [#allocation0], 64
    %227 = vst [vmem:[%s226] sm:%s3] %v225
    %s228 = scalar_lea.vmem %s0, 14
    %v229 = vld [vmem:[%s228] sm:%s3]
    %s230 = scalar_lea.vmem [#allocation0], 56
    %231 = vst [vmem:[%s230] sm:%s3] %v229
    %s232 = scalar_lea.vmem %s0, 12
    %v233 = vld [vmem:[%s232] sm:%s3]
    %s234 = scalar_lea.vmem [#allocation0], 48
    %235 = vst [vmem:[%s234] sm:%s3] %v233
    %s236 = scalar_lea.vmem %s0, 10
    %v237 = vld [vmem:[%s236] sm:%s3]
    %s238 = scalar_lea.vmem [#allocation0], 40
    %239 = vst [vmem:[%s238] sm:%s3] %v237
    %s240 = scalar_lea.vmem %s0, 8
    %v241 = vld [vmem:[%s240] sm:%s3]
    %s242 = scalar_lea.vmem [#allocation0], 32
    %243 = vst [vmem:[%s242] sm:%s3] %v241
    %s244 = scalar_lea.vmem %s0, 6
    %v245 = vld [vmem:[%s244] sm:%s3]
    %s246 = scalar_lea.vmem [#allocation0], 24
    %247 = vst [vmem:[%s246] sm:%s3] %v245
    %s248 = scalar_lea.vmem %s0, 4
    %v249 = vld [vmem:[%s248] sm:%s3]
    %s250 = scalar_lea.vmem [#allocation0], 16
    %251 = vst [vmem:[%s250] sm:%s3] %v249
    %s252 = scalar_lea.vmem %s0, 2
    %v253 = vld [vmem:[%s252] sm:%s3]
    %s254 = scalar_lea.vmem [#allocation0], 8
    %255 = vst [vmem:[%s254] sm:%s3] %v253
    %v256 = vld [vmem:[%s0] sm:%s3]
    %257 = vst [vmem:[#allocation0] sm:%s3] %v256
    %v258 = vld [vmem:[#allocation0] ss:$8 sm:$0xf]
    %v259 = vld [vmem:[#allocation0] ss:$8 sm:$0xf0]
    %vm260 = vcmask 1047556
    %v261 = vsel %vm260, %v259, %v258
    %vm262 = vcmask 64512
    %263 = vst.msk [vmem:[%s1] sm:$0xff] %vm262, %v261
    %s264 = scalar_lea.vmem [#allocation0], 64
    %v265 = vld [vmem:[%s264] ss:$8 sm:$0xf]
    %s266 = scalar_lea.vmem [#allocation0], 64
    %v267 = vld [vmem:[%s266] ss:$8 sm:$0xf0]
    %vm268 = vcmask 1047556
    %v269 = vsel %vm268, %v267, %v265
    %vm270 = vcmask 64512
    %s271 = scalar_lea.vmem %s1, 8
    %272 = vst.msk [vmem:[%s271] sm:$0xff] %vm270, %v269
    %s273 = scalar_lea.vmem [#allocation0], 128
    %v274 = vld [vmem:[%s273] ss:$8 sm:$0xf]
    %s275 = scalar_lea.vmem [#allocation0], 128
    %v276 = vld [vmem:[%s275] ss:$8 sm:$0xf0]
    %vm277 = vcmask 1047556
    %v278 = vsel %vm277, %v276, %v274
    %vm279 = vcmask 64512
    %s280 = scalar_lea.vmem %s1, 16
    %281 = vst.msk [vmem:[%s280] sm:$0xff] %vm279, %v278
    %s282 = scalar_lea.vmem [#allocation0], 192
    %v283 = vld [vmem:[%s282] ss:$8 sm:$0xf]
    %s284 = scalar_lea.vmem [#allocation0], 192
    %v285 = vld [vmem:[%s284] ss:$8 sm:$0xf0]
    %vm286 = vcmask 1047556
    %v287 = vsel %vm286, %v285, %v283
    %vm288 = vcmask 64512
    %s289 = scalar_lea.vmem %s1, 24
    %290 = vst.msk [vmem:[%s289] sm:$0xff] %vm288, %v287
    %s291 = scalar_lea.vmem [#allocation0], 256
    %v292 = vld [vmem:[%s291] ss:$8 sm:$0xf]
    %s293 = scalar_lea.vmem [#allocation0], 256
    %v294 = vld [vmem:[%s293] ss:$8 sm:$0xf0]
    %vm295 = vcmask 1047556
    %v296 = vsel %vm295, %v294, %v292
    %vm297 = vcmask 64512
    %s298 = scalar_lea.vmem %s1, 32
    %299 = vst.msk [vmem:[%s298] sm:$0xff] %vm297, %v296
    %s300 = scalar_lea.vmem [#allocation0], 320
    %v301 = vld [vmem:[%s300] ss:$8 sm:$0xf]
    %s302 = scalar_lea.vmem [#allocation0], 320
    %v303 = vld [vmem:[%s302] ss:$8 sm:$0xf0]
    %vm304 = vcmask 1047556
    %v305 = vsel %vm304, %v303, %v301
    %vm306 = vcmask 64512
    %s307 = scalar_lea.vmem %s1, 40
    %308 = vst.msk [vmem:[%s307] sm:$0xff] %vm306, %v305
    %s309 = scalar_lea.vmem [#allocation0], 384
    %v310 = vld [vmem:[%s309] ss:$8 sm:$0xf]
    %s311 = scalar_lea.vmem [#allocation0], 384
    %v312 = vld [vmem:[%s311] ss:$8 sm:$0xf0]
    %vm313 = vcmask 1047556
    %v314 = vsel %vm313, %v312, %v310
    %vm315 = vcmask 64512
    %s316 = scalar_lea.vmem %s1, 48
    %317 = vst.msk [vmem:[%s316] sm:$0xff] %vm315, %v314
    %s318 = scalar_lea.vmem [#allocation0], 448
    %v319 = vld [vmem:[%s318] ss:$8 sm:$0xf]
    %s320 = scalar_lea.vmem [#allocation0], 448
    %v321 = vld [vmem:[%s320] ss:$8 sm:$0xf0]
    %vm322 = vcmask 1047556
    %v323 = vsel %vm322, %v321, %v319
    %vm324 = vcmask 64512
    %s325 = scalar_lea.vmem %s1, 56
    %326 = vst.msk [vmem:[%s325] sm:$0xff] %vm324, %v323
    %s327 = scalar_lea.vmem [#allocation0], 1
    %v328 = vld [vmem:[%s327] ss:$8 sm:$0xf]
    %s329 = scalar_lea.vmem [#allocation0], 1
    %v330 = vld [vmem:[%s329] ss:$8 sm:$0xf0]
    %vm331 = vcmask 1047556
    %v332 = vsel %vm331, %v330, %v328
    %333 = vrot.lane.b32.xlu0 %v332, 8
    %v334 = vpop.permute.xlu0 %333
    %vm335 = vcmask 130112
    %336 = vst.msk [vmem:[%s1] sm:$0xff] %vm335, %v334
    %s337 = scalar_lea.vmem [#allocation0], 257
    %v338 = vld [vmem:[%s337] ss:$8 sm:$0xf]
    %s339 = scalar_lea.vmem [#allocation0], 257
    %v340 = vld [vmem:[%s339] ss:$8 sm:$0xf0]
    %vm341 = vcmask 1047556
    %v342 = vsel %vm341, %v340, %v338
    %343 = vrot.lane.b32.xlu0 %v342, 8
    %v344 = vpop.permute.xlu0 %343
    %vm345 = vcmask 130112
    %s346 = scalar_lea.vmem %s1, 32
    %347 = vst.msk [vmem:[%s346] sm:$0xff] %vm345, %v344
    %s348 = scalar_lea.vmem [#allocation0], 65
    %v349 = vld [vmem:[%s348] ss:$8 sm:$0xf]
    %s350 = scalar_lea.vmem [#allocation0], 65
    %v351 = vld [vmem:[%s350] ss:$8 sm:$0xf0]
    %vm352 = vcmask 1047556
    %v353 = vsel %vm352, %v351, %v349
    %354 = vrot.lane.b32.xlu0 %v353, 8
    %v355 = vpop.permute.xlu0 %354
    %vm356 = vcmask 130112
    %s357 = scalar_lea.vmem %s1, 8
    %358 = vst.msk [vmem:[%s357] sm:$0xff] %vm356, %v355
    %s359 = scalar_lea.vmem [#allocation0], 321
    %v360 = vld [vmem:[%s359] ss:$8 sm:$0xf]
    %s361 = scalar_lea.vmem [#allocation0], 321
    %v362 = vld [vmem:[%s361] ss:$8 sm:$0xf0]
    %vm363 = vcmask 1047556
    %v364 = vsel %vm363, %v362, %v360
    %365 = vrot.lane.b32.xlu0 %v364, 8
    %v366 = vpop.permute.xlu0 %365
    %vm367 = vcmask 130112
    %s368 = scalar_lea.vmem %s1, 40
    %369 = vst.msk [vmem:[%s368] sm:$0xff] %vm367, %v366
    %s370 = scalar_lea.vmem [#allocation0], 129
    %v371 = vld [vmem:[%s370] ss:$8 sm:$0xf]
    %s372 = scalar_lea.vmem [#allocation0], 129
    %v373 = vld [vmem:[%s372] ss:$8 sm:$0xf0]
    %vm374 = vcmask 1047556
    %v375 = vsel %vm374, %v373, %v371
    %376 = vrot.lane.b32.xlu0 %v375, 8
    %v377 = vpop.permute.xlu0 %376
    %vm378 = vcmask 130112
    %s379 = scalar_lea.vmem %s1, 16
    %380 = vst.msk [vmem:[%s379] sm:$0xff] %vm378, %v377
    %s381 = scalar_lea.vmem [#allocation0], 385
    %v382 = vld [vmem:[%s381] ss:$8 sm:$0xf]
    %s383 = scalar_lea.vmem [#allocation0], 385
    %v384 = vld [vmem:[%s383] ss:$8 sm:$0xf0]
    %vm385 = vcmask 1047556
    %v386 = vsel %vm385, %v384, %v382
    %387 = vrot.lane.b32.xlu0 %v386, 8
    %v388 = vpop.permute.xlu0 %387
    %vm389 = vcmask 130112
    %s390 = scalar_lea.vmem %s1, 48
    %391 = vst.msk [vmem:[%s390] sm:$0xff] %vm389, %v388
    %s392 = scalar_lea.vmem [#allocation0], 193
    %v393 = vld [vmem:[%s392] ss:$8 sm:$0xf]
    %s394 = scalar_lea.vmem [#allocation0], 193
    %v395 = vld [vmem:[%s394] ss:$8 sm:$0xf0]
    %vm396 = vcmask 1047556
    %v397 = vsel %vm396, %v395, %v393
    %398 = vrot.lane.b32.xlu0 %v397, 8
    %v399 = vpop.permute.xlu0 %398
    %vm400 = vcmask 130112
    %s401 = scalar_lea.vmem %s1, 24
    %402 = vst.msk [vmem:[%s401] sm:$0xff] %vm400, %v399
    %s403 = scalar_lea.vmem [#allocation0], 449
    %v404 = vld [vmem:[%s403] ss:$8 sm:$0xf]
    %s405 = scalar_lea.vmem [#allocation0], 449
    %v406 = vld [vmem:[%s405] ss:$8 sm:$0xf0]
    %vm407 = vcmask 1047556
    %v408 = vsel %vm407, %v406, %v404
    %409 = vrot.lane.b32.xlu0 %v408, 8
    %v410 = vpop.permute.xlu0 %409
    %vm411 = vcmask 130112
    %s412 = scalar_lea.vmem %s1, 56
    %413 = vst.msk [vmem:[%s412] sm:$0xff] %vm411, %v410

// kernel: t5_finetuner_forward.1
$region0: #{t5_finetuner_forward.1}
  #allocation0 [shape = 'u32[]', space=smem, size = 0x4, offset = 0x4, fixed_abs, tag = 'smem constant byte address 0x4 - core index']
  #allocation1 [shape = 'u32[72,128]{1,0:T(1,128)}', space=vmem, size = 0x9000, scoped, tag = 'internal scratch']
  %s0 = inlined_call_operand.vmem [shape: f32[16,32], index: 0, kind: input, shape index: {}]
  %s1 = inlined_call_operand.vmem [shape: f32[4,16,16], index: 1, kind: input, shape index: {}]
  %s2 = inlined_call_operand.vmem [shape: f32[5,32], index: 2, kind: input, shape index: {}]
  %s3 = inlined_call_operand.vmem [shape: bf16[2,32,96], index: 3, kind: input, shape index: {}]
  %s4 = inlined_call_operand.vmem [shape: bf16[2,32,64], index: 4, kind: input, shape index: {}]
  %s5 = inlined_call_operand.vmem [shape: bf16[2,96,32], index: 5, kind: input, shape index: {}]
  %s6 = inlined_call_operand.vmem [shape: f32[33,2], index: 6, kind: input, shape index: {}]
  %s7 = inlined_call_operand.hbm [shape: f32[2,2], index: 7, kind: output, shape index: {}]
  %s8 = sld [smem:[#allocation0]]
  $region38: #{t5_finetuner_forward.1} parent=0
    _
  %s10 = ssub.s32 1, %s8
  %s11 = scalar_select 0, %s10, %s8
  $region1: #{t5_finetuner_forward.1} parent=0
    #allocation2 [shape = 'u8[1024]{0}', space=vmem, size = 0x400, scoped, tag = 'output window, operand 0, single buffered']
    #allocation3 [shape = 's32[1]{0}', space=sflag, size = 0x4, scoped, tag = 'scoped memory for t5_finetuner_forward.1']
    %12 = vsyncpa [#allocation3], 0
    // Predicated region
    $region2: #{t5_finetuner_forward.1} parent=1 // pred_check
      _
    $region3: #{t5_finetuner_forward.1} parent=1 // pred_check_branch
      %14 = sbr.rel (0) target = $region5
    $region4: #{t5_finetuner_forward.1} parent=1 // pred_region
      _
    $region5: #{t5_finetuner_forward.1} parent=1 // pred_fallthru
      _
    // Predicated region
    $region6: #{t5_finetuner_forward.1} parent=1 // pred_check
      _
    $region7: #{t5_finetuner_forward.1} parent=1 // pred_check_branch
      %16 = sbr.rel (0) target = $region9
    $region8: #{t5_finetuner_forward.1} parent=1 // pred_region
      _
    $region9: #{t5_finetuner_forward.1} parent=1 // pred_fallthru
      _
    // Predicated region
    $region10: #{t5_finetuner_forward.1} parent=1 // pred_check
      _
    $region11: #{t5_finetuner_forward.1} parent=1 // pred_check_branch
      %18 = sbr.rel (0) target = $region13
    $region12: #{t5_finetuner_forward.1} parent=1 // pred_region
      _
    $region13: #{t5_finetuner_forward.1} parent=1 // pred_fallthru
      _
    // Predicated region
    $region14: #{t5_finetuner_forward.1} parent=1 // pred_check
      _
    $region15: #{t5_finetuner_forward.1} parent=1 // pred_check_branch
      %20 = sbr.rel (0) target = $region17
    $region16: #{t5_finetuner_forward.1} parent=1 // pred_region
      _
    $region17: #{t5_finetuner_forward.1} parent=1 // pred_fallthru
      _
    // Predicated region
    $region18: #{t5_finetuner_forward.1} parent=1 // pred_check
      _
    $region19: #{t5_finetuner_forward.1} parent=1 // pred_check_branch
      %22 = sbr.rel (0) target = $region21
    $region20: #{t5_finetuner_forward.1} parent=1 // pred_region
      _
    $region21: #{t5_finetuner_forward.1} parent=1 // pred_fallthru
      _
    // Predicated region
    $region22: #{t5_finetuner_forward.1} parent=1 // pred_check
      _
    $region23: #{t5_finetuner_forward.1} parent=1 // pred_check_branch
      %24 = sbr.rel (0) target = $region25
    $region24: #{t5_finetuner_forward.1} parent=1 // pred_region
      _
    $region25: #{t5_finetuner_forward.1} parent=1 // pred_fallthru
      _
    // Predicated region
    $region26: #{t5_finetuner_forward.1} parent=1 // pred_check
      _
    $region27: #{t5_finetuner_forward.1} parent=1 // pred_check_branch
      %26 = sbr.rel (0) target = $region29
    $region28: #{t5_finetuner_forward.1} parent=1 // pred_region
      _
    $region29: #{t5_finetuner_forward.1} parent=1 // pred_fallthru
      _
    %v28 = vld [vmem:[%s0] sm:$0xff]
    %v29 = vld [vmem:[%s0 + $0x8] sm:$0xff]
    %v30 = vld [vmem:[%s2] sm:$0x1]
    %v31 = vmul.f32 %v28, %v28
    %v32 = vmul.f32 %v29, %v29
    %vm33 = vcmask 261120
    %v34 = vsel %vm33, %v31, 0.0
    %35 = vadd.xlane.f32.xlu0 %v34
    %v36 = vpop.xlane.xlu0 %35
    %v37 = vsel %vm33, %v32, 0.0
    %38 = vadd.xlane.f32.xlu0 %v37
    %v39 = vpop.xlane.xlu0 %38
    %v40 = vrcp.pop 32.0
    %v41 = vmul.f32 32.0, %v40
    %v42 = vsub.f32 1.0, %v41
    %v43 = vmul.f32 %v40, %v42
    %v44 = vadd.f32 %v40, %v43
    %vm45 = vweird.f32 %v40
    %v46 = vsel %vm45, %v40, %v44
    %v47 = vmul.f32 %v36, %v46
    %v48 = vmul.f32 %v39, %v46
    %v49 = vadd.f32 %v47, 1e-06
    %v50 = vadd.f32 %v48, 1e-06
    %v51 = vrsqrt.pop %v49
    %v52 = vmul.f32 %v51, %v49
    %v53 = vmul.f32 %v52, %v51
    %v54 = vmul.f32 0.5, %v53
    %v55 = vsub.f32 1.5, %v54
    %v56 = vmul.f32 %v51, %v55
    %vm57 = vweird.f32 %v49
    %vm58 = vweird.f32 %v51
    %vm59 = vmor %vm57, %vm58
    %v60 = vsel %vm59, %v51, %v56
    %v61 = vrsqrt.pop %v50
    %v62 = vmul.f32 %v61, %v50
    %v63 = vmul.f32 %v62, %v61
    %v64 = vmul.f32 0.5, %v63
    %v65 = vsub.f32 1.5, %v64
    %v66 = vmul.f32 %v61, %v65
    %vm67 = vweird.f32 %v50
    %vm68 = vweird.f32 %v61
    %vm69 = vmor %vm67, %vm68
    %v70 = vsel %vm69, %v61, %v66
    %v71 = vmul.f32 %v28, %v60
    %v72 = vmul.f32 %v29, %v70
    %v73 = vperm.slane %v30, 0
    %v74 = vmul.f32 %v71, %v73
    %v75 = vmul.f32 %v72, %v73
    %v76 = vpack.c.bf16 %v75, %v74
    %v77 = vld [vmem:[%s3] sm:$0xf]
    %v78 = vld [vmem:[%s3 + $0x4] sm:$0xf]
    %v79 = vld [vmem:[%s3 + $0x8] sm:$0xf]
    %v80 = vld [vmem:[%s3 + $0xc] sm:$0xf]
    %v85 = vunpack.c.l.b16 %v77
    %v86 = vunpack.c.l.b16 %v78
    %v87 = vunpack.c.l.b16 %v79
    %v88 = vunpack.c.l.b16 %v80
    %v89 = vpack.c.b16 %v86, %v85
    %v90 = vpack.c.b16 %v88, %v87
    %v94 = vsel %vm33, %v76, 0
    %96 = vmatpush.bf16.msra.mxu0 0
    %97 = vmatpush.bf16.msra.mxu0 0
    %98 = vmatpush.bf16.msra.mxu0 0
    %99 = vmatpush.bf16.msra.mxu0 0
    %100 = vmatpush.bf16.msra.mxu0 0
    %101 = vmatpush.bf16.msra.mxu0 0
    %102 = vmatpush.bf16.msra.mxu0 %v90
    %103 = vmatpush.bf16.msra.mxu0 %v89
    %104 = vmatmul.bf16.gmra.mxu0 %v94
    %v105 = vpop.f32.mrf.mxu0
    %v106 = vadd.f32 0.0, %v105
    %v107 = vpop.f32.mrf.mxu0
    %v108 = vadd.f32 0.0, %v107
    %109 = vdwg.mxu0
    %v110 = vld [vmem:[%s5] sm:$0xf]
    %v111 = vld [vmem:[%s5 + $0x4] sm:$0xf]
    %v112 = vld [vmem:[%s5 + $0x8] sm:$0xf]
    %v113 = vld [vmem:[%s5 + $0xc] sm:$0xf]
    %v114 = vld [vmem:[%s5 + $0x10] sm:$0xf]
    %v115 = vld [vmem:[%s5 + $0x14] sm:$0xf]
    %v116 = vld [vmem:[%s5 + $0x18] sm:$0xf]
    %v117 = vld [vmem:[%s5 + $0x1c] sm:$0xf]
    %v118 = vld [vmem:[%s5 + $0x20] sm:$0xf]
    %v119 = vld [vmem:[%s5 + $0x24] sm:$0xf]
    %v120 = vld [vmem:[%s5 + $0x28] sm:$0xf]
    %v121 = vld [vmem:[%s5 + $0x2c] sm:$0xf]
    %v122 = vpack.c.bf16 %v108, %v106
    %v123 = vld [vmem:[%s1] sm:$0xff]
    %v124 = vld [vmem:[%s1 + $0x8] sm:$0xff]
    %126 = vrot.lane.b32.xlu0 %v122, 96
    %v127 = vpop.permute.xlu0 %126
    %vm128 = vcmask 64512
    %v130 = vsel %vm128, %v122, 0
    %v133 = vsel %vm128, %v127, 0
    %135 = vmatpush.bf16.xpose.msra.mxu0 0
    %136 = vmatpush.bf16.xpose.msra.mxu0 0
    %137 = vmatpush.bf16.xpose.msra.mxu0 0
    %138 = vmatpush.bf16.xpose.msra.mxu0 0
    %139 = vmatpush.bf16.xpose.msra.mxu0 0
    %140 = vmatpush.bf16.xpose.msra.mxu0 0
    %141 = vmatpush.bf16.xpose.msra.mxu0 0
    %142 = vmatpush.bf16.xpose.msra.mxu0 %v133
    %143 = vmatmul.bf16.gmra.mxu0 %v130
    %v144 = vpop.f32.mrf.mxu0
    %v145 = vadd.f32 %v123, %v144
    %v146 = vpop.f32.mrf.mxu0
    %v147 = vadd.f32 %v124, %v146
    %148 = vdwg.mxu0
    %vm149 = vcmask 130048
    %v150 = vsel %vm149, %v145, -inf
    %151 = vmax.xlane.f32.xlu0 %v150
    %v152 = vpop.xlane.xlu0 %151
    %v153 = vsel %vm149, %v147, -inf
    %154 = vmax.xlane.f32.xlu0 %v153
    %v155 = vpop.xlane.xlu0 %154
    %v156 = vsub.f32 %v145, %v152
    %v157 = vsub.f32 %v147, %v155
    %v158 = vmul.f32 %v156, 1.442695
    %v159 = vpow.pop %v158
    %v160 = vmul.f32 %v157, 1.442695
    %v161 = vpow.pop %v160
    %v162 = vsel %vm149, %v159, 0.0
    %163 = vadd.xlane.f32.xlu0 %v162
    %v164 = vpop.xlane.xlu0 %163
    %v165 = vsel %vm149, %v161, 0.0
    %166 = vadd.xlane.f32.xlu0 %v165
    %v167 = vpop.xlane.xlu0 %166
    %v168 = vrcp.pop %v164
    %v169 = vrcp.pop %v167
    %v170 = vmul.f32 %v159, %v168
    %v171 = vmul.f32 %v161, %v169
    %v172 = vpack.c.bf16 %v171, %v170
    %173 = vrot.lane.b32.xlu0 %v122, 64
    %v174 = vpop.permute.xlu0 %173
    %v177 = vsel %vm149, %v172, 0
    %179 = vmatpush.bf16.msra.mxu0 0
    %180 = vmatpush.bf16.msra.mxu0 0
    %181 = vmatpush.bf16.msra.mxu0 0
    %182 = vmatpush.bf16.msra.mxu0 0
    %183 = vmatpush.bf16.msra.mxu0 0
    %184 = vmatpush.bf16.msra.mxu0 0
    %185 = vmatpush.bf16.msra.mxu0 0
    %186 = vmatpush.bf16.msra.mxu0 %v174
    %187 = vmatmul.bf16.gmra.mxu0 %v177
    %v188 = vpop.f32.mrf.mxu0
    %v189 = vadd.f32 0.0, %v188
    %v190 = vpop.f32.mrf.mxu0
    %v191 = vadd.f32 0.0, %v190
    %192 = vdwg.mxu0
    %s193 = scalar_lea.vmem %s1, 16
    %v194 = vld [vmem:[%s193] sm:$0xff]
    %v195 = vld [vmem:[%s193 + $0x8] sm:$0xff]
    %196 = vrot.lane.b32.xlu0 %v122, 120
    %v197 = vpop.permute.xlu0 %196
    %198 = vrot.lane.b32.xlu0 %v122, 88
    %v199 = vpop.permute.xlu0 %198
    %v201 = vsel %vm128, %v197, 0
    %v204 = vsel %vm128, %v199, 0
    %206 = vmatpush.bf16.xpose.msra.mxu0 0
    %207 = vmatpush.bf16.xpose.msra.mxu0 0
    %208 = vmatpush.bf16.xpose.msra.mxu0 0
    %209 = vmatpush.bf16.xpose.msra.mxu0 0
    %210 = vmatpush.bf16.xpose.msra.mxu0 0
    %211 = vmatpush.bf16.xpose.msra.mxu0 0
    %212 = vmatpush.bf16.xpose.msra.mxu0 0
    %213 = vmatpush.bf16.xpose.msra.mxu0 %v204
    %214 = vmatmul.bf16.gmra.mxu0 %v201
    %v215 = vpop.f32.mrf.mxu0
    %v216 = vadd.f32 %v194, %v215
    %v217 = vpop.f32.mrf.mxu0
    %v218 = vadd.f32 %v195, %v217
    %219 = vdwg.mxu0
    %v220 = vsel %vm149, %v216, -inf
    %221 = vmax.xlane.f32.xlu0 %v220
    %v222 = vpop.xlane.xlu0 %221
    %v223 = vsel %vm149, %v218, -inf
    %224 = vmax.xlane.f32.xlu0 %v223
    %v225 = vpop.xlane.xlu0 %224
    %v226 = vsub.f32 %v216, %v222
    %v227 = vsub.f32 %v218, %v225
    %v228 = vmul.f32 %v226, 1.442695
    %v229 = vpow.pop %v228
    %v230 = vmul.f32 %v227, 1.442695
    %v231 = vpow.pop %v230
    %v232 = vsel %vm149, %v229, 0.0
    %233 = vadd.xlane.f32.xlu0 %v232
    %v234 = vpop.xlane.xlu0 %233
    %v235 = vsel %vm149, %v231, 0.0
    %236 = vadd.xlane.f32.xlu0 %v235
    %v237 = vpop.xlane.xlu0 %236
    %v238 = vrcp.pop %v234
    %v239 = vrcp.pop %v237
    %v240 = vmul.f32 %v229, %v238
    %v241 = vmul.f32 %v231, %v239
    %v242 = vpack.c.bf16 %v241, %v240
    %243 = vrot.lane.b32.xlu0 %v122, 56
    %v244 = vpop.permute.xlu0 %243
    %v247 = vsel %vm149, %v242, 0
    %249 = vmatpush.bf16.msra.mxu0 0
    %250 = vmatpush.bf16.msra.mxu0 0
    %251 = vmatpush.bf16.msra.mxu0 0
    %252 = vmatpush.bf16.msra.mxu0 0
    %253 = vmatpush.bf16.msra.mxu0 0
    %254 = vmatpush.bf16.msra.mxu0 0
    %255 = vmatpush.bf16.msra.mxu0 0
    %256 = vmatpush.bf16.msra.mxu0 %v244
    %257 = vmatmul.bf16.gmra.mxu0 %v247
    %v258 = vpop.f32.mrf.mxu0
    %v259 = vadd.f32 0.0, %v258
    %v260 = vpop.f32.mrf.mxu0
    %v261 = vadd.f32 0.0, %v260
    %262 = vdwg.mxu0
    %s263 = scalar_lea.vmem %s1, 32
    %v264 = vld [vmem:[%s263] sm:$0xff]
    %v265 = vld [vmem:[%s263 + $0x8] sm:$0xff]
    %266 = vrot.lane.b32.xlu0 %v122, 112
    %v267 = vpop.permute.xlu0 %266
    %268 = vrot.lane.b32.xlu0 %v122, 80
    %v269 = vpop.permute.xlu0 %268
    %v271 = vsel %vm128, %v267, 0
    %v274 = vsel %vm128, %v269, 0
    %276 = vmatpush.bf16.xpose.msra.mxu0 0
    %277 = vmatpush.bf16.xpose.msra.mxu0 0
    %278 = vmatpush.bf16.xpose.msra.mxu0 0
    %279 = vmatpush.bf16.xpose.msra.mxu0 0
    %280 = vmatpush.bf16.xpose.msra.mxu0 0
    %281 = vmatpush.bf16.xpose.msra.mxu0 0
    %282 = vmatpush.bf16.xpose.msra.mxu0 0
    %283 = vmatpush.bf16.xpose.msra.mxu0 %v274
    %284 = vmatmul.bf16.gmra.mxu0 %v271
    %v285 = vpop.f32.mrf.mxu0
    %v286 = vadd.f32 %v264, %v285
    %v287 = vpop.f32.mrf.mxu0
    %v288 = vadd.f32 %v265, %v287
    %289 = vdwg.mxu0
    %v290 = vsel %vm149, %v286, -inf
    %291 = vmax.xlane.f32.xlu0 %v290
    %v292 = vpop.xlane.xlu0 %291
    %v293 = vsel %vm149, %v288, -inf
    %294 = vmax.xlane.f32.xlu0 %v293
    %v295 = vpop.xlane.xlu0 %294
    %v296 = vsub.f32 %v286, %v292
    %v297 = vsub.f32 %v288, %v295
    %v298 = vmul.f32 %v296, 1.442695
    %v299 = vpow.pop %v298
    %v300 = vmul.f32 %v297, 1.442695
    %v301 = vpow.pop %v300
    %v302 = vsel %vm149, %v299, 0.0
    %303 = vadd.xlane.f32.xlu0 %v302
    %v304 = vpop.xlane.xlu0 %303
    %v305 = vsel %vm149, %v301, 0.0
    %306 = vadd.xlane.f32.xlu0 %v305
    %v307 = vpop.xlane.xlu0 %306
    %v308 = vrcp.pop %v304
    %v309 = vrcp.pop %v307
    %v310 = vmul.f32 %v299, %v308
    %v311 = vmul.f32 %v301, %v309
    %v312 = vpack.c.bf16 %v311, %v310
    %313 = vrot.lane.b32.xlu0 %v122, 48
    %v314 = vpop.permute.xlu0 %313
    %v317 = vsel %vm149, %v312, 0
    %319 = vmatpush.bf16.msra.mxu0 0
    %320 = vmatpush.bf16.msra.mxu0 0
    %321 = vmatpush.bf16.msra.mxu0 0
    %322 = vmatpush.bf16.msra.mxu0 0
    %323 = vmatpush.bf16.msra.mxu0 0
    %324 = vmatpush.bf16.msra.mxu0 0
    %325 = vmatpush.bf16.msra.mxu0 0
    %326 = vmatpush.bf16.msra.mxu0 %v314
    %327 = vmatmul.bf16.gmra.mxu0 %v317
    %v328 = vpop.f32.mrf.mxu0
    %v329 = vadd.f32 0.0, %v328
    %v330 = vpop.f32.mrf.mxu0
    %v331 = vadd.f32 0.0, %v330
    %332 = vdwg.mxu0
    %s333 = scalar_lea.vmem %s1, 48
    %v334 = vld [vmem:[%s333] sm:$0xff]
    %v335 = vld [vmem:[%s333 + $0x8] sm:$0xff]
    %336 = vrot.lane.b32.xlu0 %v122, 104
    %v337 = vpop.permute.xlu0 %336
    %338 = vrot.lane.b32.xlu0 %v122, 72
    %v339 = vpop.permute.xlu0 %338
    %v341 = vsel %vm128, %v337, 0
    %v344 = vsel %vm128, %v339, 0
    %346 = vmatpush.bf16.xpose.msra.mxu0 0
    %347 = vmatpush.bf16.xpose.msra.mxu0 0
    %348 = vmatpush.bf16.xpose.msra.mxu0 0
    %349 = vmatpush.bf16.xpose.msra.mxu0 0
    %350 = vmatpush.bf16.xpose.msra.mxu0 0
    %351 = vmatpush.bf16.xpose.msra.mxu0 0
    %352 = vmatpush.bf16.xpose.msra.mxu0 0
    %353 = vmatpush.bf16.xpose.msra.mxu0 %v344
    %354 = vmatmul.bf16.gmra.mxu0 %v341
    %v355 = vpop.f32.mrf.mxu0
    %v356 = vadd.f32 %v334, %v355
    %v357 = vpop.f32.mrf.mxu0
    %v358 = vadd.f32 %v335, %v357
    %359 = vdwg.mxu0
    %v360 = vsel %vm149, %v356, -inf
    %361 = vmax.xlane.f32.xlu0 %v360
    %v362 = vpop.xlane.xlu0 %361
    %v363 = vsel %vm149, %v358, -inf
    %364 = vmax.xlane.f32.xlu0 %v363
    %v365 = vpop.xlane.xlu0 %364
    %v366 = vsub.f32 %v356, %v362
    %v367 = vsub.f32 %v358, %v365
    %v368 = vmul.f32 %v366, 1.442695
    %v369 = vpow.pop %v368
    %v370 = vmul.f32 %v367, 1.442695
    %v371 = vpow.pop %v370
    %v372 = vsel %vm149, %v369, 0.0
    %373 = vadd.xlane.f32.xlu0 %v372
    %v374 = vpop.xlane.xlu0 %373
    %v375 = vsel %vm149, %v371, 0.0
    %376 = vadd.xlane.f32.xlu0 %v375
    %v377 = vpop.xlane.xlu0 %376
    %v378 = vrcp.pop %v374
    %v379 = vrcp.pop %v377
    %v380 = vmul.f32 %v369, %v378
    %v381 = vmul.f32 %v371, %v379
    %v382 = vpack.c.bf16 %v381, %v380
    %383 = vrot.lane.b32.xlu0 %v122, 40
    %v384 = vpop.permute.xlu0 %383
    %v387 = vsel %vm149, %v382, 0
    %389 = vmatpush.bf16.msra.mxu0 0
    %390 = vmatpush.bf16.msra.mxu0 0
    %391 = vmatpush.bf16.msra.mxu0 0
    %392 = vmatpush.bf16.msra.mxu0 0
    %393 = vmatpush.bf16.msra.mxu0 0
    %394 = vmatpush.bf16.msra.mxu0 0
    %395 = vmatpush.bf16.msra.mxu0 0
    %396 = vmatpush.bf16.msra.mxu0 %v384
    %397 = vmatmul.bf16.gmra.mxu0 %v387
    %v398 = vpop.f32.mrf.mxu0
    %v399 = vadd.f32 0.0, %v398
    %v400 = vpop.f32.mrf.mxu0
    %v401 = vadd.f32 0.0, %v400
    %402 = vdwg.mxu0
    %405 = vrot.lane.b32.xlu0 %v259, 8
    %v406 = vpop.permute.xlu0 %405
    %407 = vrot.lane.b32.xlu0 %v261, 8
    %v408 = vpop.permute.xlu0 %407
    %413 = vrot.lane.b32.xlu0 %v329, 16
    %v414 = vpop.permute.xlu0 %413
    %415 = vrot.lane.b32.xlu0 %v331, 16
    %v416 = vpop.permute.xlu0 %415
    %421 = vrot.lane.b32.xlu0 %v399, 24
    %v422 = vpop.permute.xlu0 %421
    %423 = vrot.lane.b32.xlu0 %v401, 24
    %v424 = vpop.permute.xlu0 %423
    %v427 = vsel %vm128, %v189, %v406
    %v428 = vsel %vm128, %v191, %v408
    %v429 = vsel %vm149, %v427, %v414
    %v430 = vsel %vm149, %v428, %v416
    %vm431 = vcmask 195584
    %v432 = vsel %vm431, %v429, %v422
    %v433 = vsel %vm431, %v430, %v424
    %v434 = vpack.c.bf16 %v433, %v432
    %v439 = vunpack.c.l.b16 %v110
    %v440 = vunpack.c.l.b16 %v111
    %v441 = vunpack.c.l.b16 %v112
    %v442 = vunpack.c.l.b16 %v113
    %v443 = vpack.c.b16 %v440, %v439
    %v444 = vpack.c.b16 %v442, %v441
    %v448 = vsel %vm33, %v434, 0
    %450 = vmatpush.bf16.msra.mxu0 0
    %451 = vmatpush.bf16.msra.mxu0 0
    %452 = vmatpush.bf16.msra.mxu0 0
    %453 = vmatpush.bf16.msra.mxu0 0
    %454 = vmatpush.bf16.msra.mxu0 0
    %455 = vmatpush.bf16.msra.mxu0 0
    %456 = vmatpush.bf16.msra.mxu0 %v444
    %457 = vmatpush.bf16.msra.mxu0 %v443
    %458 = vmatmul.bf16.gmra.mxu0 %v448
    %v459 = vpop.f32.mrf.mxu0
    %v460 = vadd.f32 0.0, %v459
    %v461 = vpop.f32.mrf.mxu0
    %v462 = vadd.f32 0.0, %v461
    %463 = vdwg.mxu0
    %v464 = vadd.f32 %v28, %v460
    %v465 = vadd.f32 %v29, %v462
    %v466 = vld [vmem:[%s2 + $0x1] sm:$0x1]
    %v467 = vmul.f32 %v464, %v464
    %v468 = vmul.f32 %v465, %v465
    %v469 = vsel %vm33, %v467, 0.0
    %470 = vadd.xlane.f32.xlu0 %v469
    %v471 = vpop.xlane.xlu0 %470
    %v472 = vsel %vm33, %v468, 0.0
    %473 = vadd.xlane.f32.xlu0 %v472
    %v474 = vpop.xlane.xlu0 %473
    %v475 = vmul.f32 %v471, %v46
    %v476 = vmul.f32 %v474, %v46
    %v477 = vadd.f32 %v475, 1e-06
    %v478 = vadd.f32 %v476, 1e-06
    %v479 = vrsqrt.pop %v477
    %v480 = vmul.f32 %v479, %v477
    %v481 = vmul.f32 %v480, %v479
    %v482 = vmul.f32 0.5, %v481
    %v483 = vsub.f32 1.5, %v482
    %v484 = vmul.f32 %v479, %v483
    %vm485 = vweird.f32 %v477
    %vm486 = vweird.f32 %v479
    %vm487 = vmor %vm485, %vm486
    %v488 = vsel %vm487, %v479, %v484
    %v489 = vrsqrt.pop %v478
    %v490 = vmul.f32 %v489, %v478
    %v491 = vmul.f32 %v490, %v489
    %v492 = vmul.f32 0.5, %v491
    %v493 = vsub.f32 1.5, %v492
    %v494 = vmul.f32 %v489, %v493
    %vm495 = vweird.f32 %v478
    %vm496 = vweird.f32 %v489
    %vm497 = vmor %vm495, %vm496
    %v498 = vsel %vm497, %v489, %v494
    %v499 = vmul.f32 %v464, %v488
    %v500 = vmul.f32 %v465, %v498
    %v501 = vperm.slane %v466, 0
    %v502 = vmul.f32 %v499, %v501
    %v503 = vmul.f32 %v500, %v501
    %v504 = vpack.c.bf16 %v503, %v502
    %v505 = vld [vmem:[%s4] sm:$0xf]
    %v506 = vld [vmem:[%s4 + $0x4] sm:$0xf]
    %v507 = vld [vmem:[%s4 + $0x8] sm:$0xf]
    %v508 = vld [vmem:[%s4 + $0xc] sm:$0xf]
    %v513 = vunpack.c.l.b16 %v505
    %v514 = vunpack.c.l.b16 %v506
    %v515 = vunpack.c.l.b16 %v507
    %v516 = vunpack.c.l.b16 %v508
    %v517 = vpack.c.b16 %v514, %v513
    %v518 = vpack.c.b16 %v516, %v515
    %v522 = vsel %vm33, %v504, 0
    %524 = vmatpush.bf16.msra.mxu0 0
    %525 = vmatpush.bf16.msra.mxu0 0
    %526 = vmatpush.bf16.msra.mxu0 0
    %527 = vmatpush.bf16.msra.mxu0 0
    %528 = vmatpush.bf16.msra.mxu0 0
    %529 = vmatpush.bf16.msra.mxu0 0
    %530 = vmatpush.bf16.msra.mxu0 %v518
    %531 = vmatpush.bf16.msra.mxu0 %v517
    %532 = vmatmul.bf16.gmra.mxu0 %v522
    %v533 = vpop.f32.mrf.mxu0
    %v534 = vadd.f32 0.0, %v533
    %v535 = vpop.f32.mrf.mxu0
    %v536 = vadd.f32 0.0, %v535
    %537 = vdwg.mxu0
    %v538 = vmax.f32 %v534, 0.0
    %v539 = vmax.f32 %v536, 0.0
    %v540 = vpack.c.bf16 %v539, %v538
    %v549 = vunpack.c.l.b16 %v114
    %v550 = vunpack.c.l.b16 %v115
    %v551 = vunpack.c.l.b16 %v116
    %v552 = vunpack.c.l.b16 %v117
    %v553 = vunpack.c.l.b16 %v118
    %v554 = vunpack.c.l.b16 %v119
    %v555 = vunpack.c.l.b16 %v120
    %v556 = vunpack.c.l.b16 %v121
    %v557 = vpack.c.b16 %v550, %v549
    %v558 = vpack.c.b16 %v552, %v551
    %v559 = vpack.c.b16 %v554, %v553
    %v560 = vpack.c.b16 %v556, %v555
    %vm565 = vcmask 523264
    %v567 = vsel %vm565, %v540, 0
    %569 = vmatpush.bf16.msra.mxu0 0
    %570 = vmatpush.bf16.msra.mxu0 0
    %571 = vmatpush.bf16.msra.mxu0 0
    %572 = vmatpush.bf16.msra.mxu0 0
    %573 = vmatpush.bf16.msra.mxu0 %v560
    %574 = vmatpush.bf16.msra.mxu0 %v559
    %575 = vmatpush.bf16.msra.mxu0 %v558
    %576 = vmatpush.bf16.msra.mxu0 %v557
    %577 = vmatmul.bf16.gmra.mxu0 %v567
    %v578 = vpop.f32.mrf.mxu0
    %v579 = vadd.f32 0.0, %v578
    %v580 = vpop.f32.mrf.mxu0
    %v581 = vadd.f32 0.0, %v580
    %582 = vdwg.mxu0
    %v583 = vadd.f32 %v464, %v579
    %v584 = vadd.f32 %v465, %v581
    %v585 = vld [vmem:[%s2 + $0x2] sm:$0x1]
    %v586 = vmul.f32 %v583, %v583
    %v587 = vmul.f32 %v584, %v584
    %v588 = vsel %vm33, %v586, 0.0
    %589 = vadd.xlane.f32.xlu0 %v588
    %v590 = vpop.xlane.xlu0 %589
    %v591 = vsel %vm33, %v587, 0.0
    %592 = vadd.xlane.f32.xlu0 %v591
    %v593 = vpop.xlane.xlu0 %592
    %v594 = vmul.f32 %v590, %v46
    %v595 = vmul.f32 %v593, %v46
    %v596 = vadd.f32 %v594, 1e-06
    %v597 = vadd.f32 %v595, 1e-06
    %v598 = vrsqrt.pop %v596
    %v599 = vmul.f32 %v598, %v596
    %v600 = vmul.f32 %v599, %v598
    %v601 = vmul.f32 0.5, %v600
    %v602 = vsub.f32 1.5, %v601
    %v603 = vmul.f32 %v598, %v602
    %vm604 = vweird.f32 %v596
    %vm605 = vweird.f32 %v598
    %vm606 = vmor %vm604, %vm605
    %v607 = vsel %vm606, %v598, %v603
    %v608 = vrsqrt.pop %v597
    %v609 = vmul.f32 %v608, %v597
    %v610 = vmul.f32 %v609, %v608
    %v611 = vmul.f32 0.5, %v610
    %v612 = vsub.f32 1.5, %v611
    %v613 = vmul.f32 %v608, %v612
    %vm614 = vweird.f32 %v597
    %vm615 = vweird.f32 %v608
    %vm616 = vmor %vm614, %vm615
    %v617 = vsel %vm616, %v608, %v613
    %v618 = vmul.f32 %v583, %v607
    %v619 = vmul.f32 %v584, %v617
    %v620 = vperm.slane %v585, 0
    %v621 = vmul.f32 %v618, %v620
    %v622 = vmul.f32 %v619, %v620
    %v623 = vpack.c.bf16 %v622, %v621
    %s624 = scalar_lea.vmem %s3, 16
    %v625 = vld [vmem:[%s624] sm:$0xf]
    %v626 = vld [vmem:[%s624 + $0x4] sm:$0xf]
    %v627 = vld [vmem:[%s624 + $0x8] sm:$0xf]
    %v628 = vld [vmem:[%s624 + $0xc] sm:$0xf]
    %v633 = vunpack.c.l.b16 %v625
    %v634 = vunpack.c.l.b16 %v626
    %v635 = vunpack.c.l.b16 %v627
    %v636 = vunpack.c.l.b16 %v628
    %v637 = vpack.c.b16 %v634, %v633
    %v638 = vpack.c.b16 %v636, %v635
    %v642 = vsel %vm33, %v623, 0
    %644 = vmatpush.bf16.msra.mxu0 0
    %645 = vmatpush.bf16.msra.mxu0 0
    %646 = vmatpush.bf16.msra.mxu0 0
    %647 = vmatpush.bf16.msra.mxu0 0
    %648 = vmatpush.bf16.msra.mxu0 0
    %649 = vmatpush.bf16.msra.mxu0 0
    %650 = vmatpush.bf16.msra.mxu0 %v638
    %651 = vmatpush.bf16.msra.mxu0 %v637
    %652 = vmatmul.bf16.gmra.mxu0 %v642
    %v653 = vpop.f32.mrf.mxu0
    %v654 = vadd.f32 0.0, %v653
    %v655 = vpop.f32.mrf.mxu0
    %v656 = vadd.f32 0.0, %v655
    %657 = vdwg.mxu0
    %s658 = scalar_lea.vmem %s5, 48
    %v659 = vld [vmem:[%s658] sm:$0xf]
    %v660 = vld [vmem:[%s658 + $0x4] sm:$0xf]
    %v661 = vld [vmem:[%s658 + $0x8] sm:$0xf]
    %v662 = vld [vmem:[%s658 + $0xc] sm:$0xf]
    %v663 = vld [vmem:[%s658 + $0x10] sm:$0xf]
    %v664 = vld [vmem:[%s658 + $0x14] sm:$0xf]
    %v665 = vld [vmem:[%s658 + $0x18] sm:$0xf]
    %v666 = vld [vmem:[%s658 + $0x1c] sm:$0xf]
    %v667 = vld [vmem:[%s658 + $0x20] sm:$0xf]
    %v668 = vld [vmem:[%s658 + $0x24] sm:$0xf]
    %v669 = vld [vmem:[%s658 + $0x28] sm:$0xf]
    %v670 = vld [vmem:[%s658 + $0x2c] sm:$0xf]
    %v671 = vpack.c.bf16 %v656, %v654
    %673 = vrot.lane.b32.xlu0 %v671, 96
    %v674 = vpop.permute.xlu0 %673
    %v676 = vsel %vm128, %v671, 0
    %v679 = vsel %vm128, %v674, 0
    %681 = vmatpush.bf16.xpose.msra.mxu0 0
    %682 = vmatpush.bf16.xpose.msra.mxu0 0
    %683 = vmatpush.bf16.xpose.msra.mxu0 0
    %684 = vmatpush.bf16.xpose.msra.mxu0 0
    %685 = vmatpush.bf16.xpose.msra.mxu0 0
    %686 = vmatpush.bf16.xpose.msra.mxu0 0
    %687 = vmatpush.bf16.xpose.msra.mxu0 0
    %688 = vmatpush.bf16.xpose.msra.mxu0 %v679
    %689 = vmatmul.bf16.gmra.mxu0 %v676
    %v690 = vpop.f32.mrf.mxu0
    %v691 = vadd.f32 %v123, %v690
    %v692 = vpop.f32.mrf.mxu0
    %v693 = vadd.f32 %v124, %v692
    %694 = vdwg.mxu0
    %v695 = vsel %vm149, %v691, -inf
    %696 = vmax.xlane.f32.xlu0 %v695
    %v697 = vpop.xlane.xlu0 %696
    %v698 = vsel %vm149, %v693, -inf
    %699 = vmax.xlane.f32.xlu0 %v698
    %v700 = vpop.xlane.xlu0 %699
    %v701 = vsub.f32 %v691, %v697
    %v702 = vsub.f32 %v693, %v700
    %v703 = vmul.f32 %v701, 1.442695
    %v704 = vpow.pop %v703
    %v705 = vmul.f32 %v702, 1.442695
    %v706 = vpow.pop %v705
    %v707 = vsel %vm149, %v704, 0.0
    %708 = vadd.xlane.f32.xlu0 %v707
    %v709 = vpop.xlane.xlu0 %708
    %v710 = vsel %vm149, %v706, 0.0
    %711 = vadd.xlane.f32.xlu0 %v710
    %v712 = vpop.xlane.xlu0 %711
    %v713 = vrcp.pop %v709
    %v714 = vrcp.pop %v712
    %v715 = vmul.f32 %v704, %v713
    %v716 = vmul.f32 %v706, %v714
    %v717 = vpack.c.bf16 %v716, %v715
    %718 = vrot.lane.b32.xlu0 %v671, 64
    %v719 = vpop.permute.xlu0 %718
    %v722 = vsel %vm149, %v717, 0
    %724 = vmatpush.bf16.msra.mxu0 0
    %725 = vmatpush.bf16.msra.mxu0 0
    %726 = vmatpush.bf16.msra.mxu0 0
    %727 = vmatpush.bf16.msra.mxu0 0
    %728 = vmatpush.bf16.msra.mxu0 0
    %729 = vmatpush.bf16.msra.mxu0 0
    %730 = vmatpush.bf16.msra.mxu0 0
    %731 = vmatpush.bf16.msra.mxu0 %v719
    %732 = vmatmul.bf16.gmra.mxu0 %v722
    %v733 = vpop.f32.mrf.mxu0
    %v734 = vadd.f32 0.0, %v733
    %v735 = vpop.f32.mrf.mxu0
    %v736 = vadd.f32 0.0, %v735
    %737 = vdwg.mxu0
    %738 = vrot.lane.b32.xlu0 %v671, 120
    %v739 = vpop.permute.xlu0 %738
    %740 = vrot.lane.b32.xlu0 %v671, 88
    %v741 = vpop.permute.xlu0 %740
    %v743 = vsel %vm128, %v739, 0
    %v746 = vsel %vm128, %v741, 0
    %748 = vmatpush.bf16.xpose.msra.mxu0 0
    %749 = vmatpush.bf16.xpose.msra.mxu0 0
    %750 = vmatpush.bf16.xpose.msra.mxu0 0
    %751 = vmatpush.bf16.xpose.msra.mxu0 0
    %752 = vmatpush.bf16.xpose.msra.mxu0 0
    %753 = vmatpush.bf16.xpose.msra.mxu0 0
    %754 = vmatpush.bf16.xpose.msra.mxu0 0
    %755 = vmatpush.bf16.xpose.msra.mxu0 %v746
    %756 = vmatmul.bf16.gmra.mxu0 %v743
    %v757 = vpop.f32.mrf.mxu0
    %v758 = vadd.f32 %v194, %v757
    %v759 = vpop.f32.mrf.mxu0
    %v760 = vadd.f32 %v195, %v759
    %761 = vdwg.mxu0
    %v762 = vsel %vm149, %v758, -inf
    %763 = vmax.xlane.f32.xlu0 %v762
    %v764 = vpop.xlane.xlu0 %763
    %v765 = vsel %vm149, %v760, -inf
    %766 = vmax.xlane.f32.xlu0 %v765
    %v767 = vpop.xlane.xlu0 %766
    %v768 = vsub.f32 %v758, %v764
    %v769 = vsub.f32 %v760, %v767
    %v770 = vmul.f32 %v768, 1.442695
    %v771 = vpow.pop %v770
    %v772 = vmul.f32 %v769, 1.442695
    %v773 = vpow.pop %v772
    %v774 = vsel %vm149, %v771, 0.0
    %775 = vadd.xlane.f32.xlu0 %v774
    %v776 = vpop.xlane.xlu0 %775
    %v777 = vsel %vm149, %v773, 0.0
    %778 = vadd.xlane.f32.xlu0 %v777
    %v779 = vpop.xlane.xlu0 %778
    %v780 = vrcp.pop %v776
    %v781 = vrcp.pop %v779
    %v782 = vmul.f32 %v771, %v780
    %v783 = vmul.f32 %v773, %v781
    %v784 = vpack.c.bf16 %v783, %v782
    %785 = vrot.lane.b32.xlu0 %v671, 56
    %v786 = vpop.permute.xlu0 %785
    %v789 = vsel %vm149, %v784, 0
    %791 = vmatpush.bf16.msra.mxu0 0
    %792 = vmatpush.bf16.msra.mxu0 0
    %793 = vmatpush.bf16.msra.mxu0 0
    %794 = vmatpush.bf16.msra.mxu0 0
    %795 = vmatpush.bf16.msra.mxu0 0
    %796 = vmatpush.bf16.msra.mxu0 0
    %797 = vmatpush.bf16.msra.mxu0 0
    %798 = vmatpush.bf16.msra.mxu0 %v786
    %799 = vmatmul.bf16.gmra.mxu0 %v789
    %v800 = vpop.f32.mrf.mxu0
    %v801 = vadd.f32 0.0, %v800
    %v802 = vpop.f32.mrf.mxu0
    %v803 = vadd.f32 0.0, %v802
    %804 = vdwg.mxu0
    %805 = vrot.lane.b32.xlu0 %v671, 112
    %v806 = vpop.permute.xlu0 %805
    %807 = vrot.lane.b32.xlu0 %v671, 80
    %v808 = vpop.permute.xlu0 %807
    %v810 = vsel %vm128, %v806, 0
    %v813 = vsel %vm128, %v808, 0
    %815 = vmatpush.bf16.xpose.msra.mxu0 0
    %816 = vmatpush.bf16.xpose.msra.mxu0 0
    %817 = vmatpush.bf16.xpose.msra.mxu0 0
    %818 = vmatpush.bf16.xpose.msra.mxu0 0
    %819 = vmatpush.bf16.xpose.msra.mxu0 0
    %820 = vmatpush.bf16.xpose.msra.mxu0 0
    %821 = vmatpush.bf16.xpose.msra.mxu0 0
    %822 = vmatpush.bf16.xpose.msra.mxu0 %v813
    %823 = vmatmul.bf16.gmra.mxu0 %v810
    %v824 = vpop.f32.mrf.mxu0
    %v825 = vadd.f32 %v264, %v824
    %v826 = vpop.f32.mrf.mxu0
    %v827 = vadd.f32 %v265, %v826
    %828 = vdwg.mxu0
    %v829 = vsel %vm149, %v825, -inf
    %830 = vmax.xlane.f32.xlu0 %v829
    %v831 = vpop.xlane.xlu0 %830
    %v832 = vsel %vm149, %v827, -inf
    %833 = vmax.xlane.f32.xlu0 %v832
    %v834 = vpop.xlane.xlu0 %833
    %v835 = vsub.f32 %v825, %v831
    %v836 = vsub.f32 %v827, %v834
    %v837 = vmul.f32 %v835, 1.442695
    %v838 = vpow.pop %v837
    %v839 = vmul.f32 %v836, 1.442695
    %v840 = vpow.pop %v839
    %v841 = vsel %vm149, %v838, 0.0
    %842 = vadd.xlane.f32.xlu0 %v841
    %v843 = vpop.xlane.xlu0 %842
    %v844 = vsel %vm149, %v840, 0.0
    %845 = vadd.xlane.f32.xlu0 %v844
    %v846 = vpop.xlane.xlu0 %845
    %v847 = vrcp.pop %v843
    %v848 = vrcp.pop %v846
    %v849 = vmul.f32 %v838, %v847
    %v850 = vmul.f32 %v840, %v848
    %v851 = vpack.c.bf16 %v850, %v849
    %852 = vrot.lane.b32.xlu0 %v671, 48
    %v853 = vpop.permute.xlu0 %852
    %v856 = vsel %vm149, %v851, 0
    %858 = vmatpush.bf16.msra.mxu0 0
    %859 = vmatpush.bf16.msra.mxu0 0
    %860 = vmatpush.bf16.msra.mxu0 0
    %861 = vmatpush.bf16.msra.mxu0 0
    %862 = vmatpush.bf16.msra.mxu0 0
    %863 = vmatpush.bf16.msra.mxu0 0
    %864 = vmatpush.bf16.msra.mxu0 0
    %865 = vmatpush.bf16.msra.mxu0 %v853
    %866 = vmatmul.bf16.gmra.mxu0 %v856
    %v867 = vpop.f32.mrf.mxu0
    %v868 = vadd.f32 0.0, %v867
    %v869 = vpop.f32.mrf.mxu0
    %v870 = vadd.f32 0.0, %v869
    %871 = vdwg.mxu0
    %872 = vrot.lane.b32.xlu0 %v671, 104
    %v873 = vpop.permute.xlu0 %872
    %874 = vrot.lane.b32.xlu0 %v671, 72
    %v875 = vpop.permute.xlu0 %874
    %v877 = vsel %vm128, %v873, 0
    %v880 = vsel %vm128, %v875, 0
    %882 = vmatpush.bf16.xpose.msra.mxu0 0
    %883 = vmatpush.bf16.xpose.msra.mxu0 0
    %884 = vmatpush.bf16.xpose.msra.mxu0 0
    %885 = vmatpush.bf16.xpose.msra.mxu0 0
    %886 = vmatpush.bf16.xpose.msra.mxu0 0
    %887 = vmatpush.bf16.xpose.msra.mxu0 0
    %888 = vmatpush.bf16.xpose.msra.mxu0 0
    %889 = vmatpush.bf16.xpose.msra.mxu0 %v880
    %890 = vmatmul.bf16.gmra.mxu0 %v877
    %v891 = vpop.f32.mrf.mxu0
    %v892 = vadd.f32 %v334, %v891
    %v893 = vpop.f32.mrf.mxu0
    %v894 = vadd.f32 %v335, %v893
    %895 = vdwg.mxu0
    %v896 = vsel %vm149, %v892, -inf
    %897 = vmax.xlane.f32.xlu0 %v896
    %v898 = vpop.xlane.xlu0 %897
    %v899 = vsel %vm149, %v894, -inf
    %900 = vmax.xlane.f32.xlu0 %v899
    %v901 = vpop.xlane.xlu0 %900
    %v902 = vsub.f32 %v892, %v898
    %v903 = vsub.f32 %v894, %v901
    %v904 = vmul.f32 %v902, 1.442695
    %v905 = vpow.pop %v904
    %v906 = vmul.f32 %v903, 1.442695
    %v907 = vpow.pop %v906
    %v908 = vsel %vm149, %v905, 0.0
    %909 = vadd.xlane.f32.xlu0 %v908
    %v910 = vpop.xlane.xlu0 %909
    %v911 = vsel %vm149, %v907, 0.0
    %912 = vadd.xlane.f32.xlu0 %v911
    %v913 = vpop.xlane.xlu0 %912
    %v914 = vrcp.pop %v910
    %v915 = vrcp.pop %v913
    %v916 = vmul.f32 %v905, %v914
    %v917 = vmul.f32 %v907, %v915
    %v918 = vpack.c.bf16 %v917, %v916
    %919 = vrot.lane.b32.xlu0 %v671, 40
    %v920 = vpop.permute.xlu0 %919
    %v923 = vsel %vm149, %v918, 0
    %925 = vmatpush.bf16.msra.mxu0 0
    %926 = vmatpush.bf16.msra.mxu0 0
    %927 = vmatpush.bf16.msra.mxu0 0
    %928 = vmatpush.bf16.msra.mxu0 0
    %929 = vmatpush.bf16.msra.mxu0 0
    %930 = vmatpush.bf16.msra.mxu0 0
    %931 = vmatpush.bf16.msra.mxu0 0
    %932 = vmatpush.bf16.msra.mxu0 %v920
    %933 = vmatmul.bf16.gmra.mxu0 %v923
    %v934 = vpop.f32.mrf.mxu0
    %v935 = vadd.f32 0.0, %v934
    %v936 = vpop.f32.mrf.mxu0
    %v937 = vadd.f32 0.0, %v936
    %938 = vdwg.mxu0
    %941 = vrot.lane.b32.xlu0 %v801, 8
    %v942 = vpop.permute.xlu0 %941
    %943 = vrot.lane.b32.xlu0 %v803, 8
    %v944 = vpop.permute.xlu0 %943
    %949 = vrot.lane.b32.xlu0 %v868, 16
    %v950 = vpop.permute.xlu0 %949
    %951 = vrot.lane.b32.xlu0 %v870, 16
    %v952 = vpop.permute.xlu0 %951
    %957 = vrot.lane.b32.xlu0 %v935, 24
    %v958 = vpop.permute.xlu0 %957
    %959 = vrot.lane.b32.xlu0 %v937, 24
    %v960 = vpop.permute.xlu0 %959
    %v963 = vsel %vm128, %v734, %v942
    %v964 = vsel %vm128, %v736, %v944
    %v965 = vsel %vm149, %v963, %v950
    %v966 = vsel %vm149, %v964, %v952
    %v967 = vsel %vm431, %v965, %v958
    %v968 = vsel %vm431, %v966, %v960
    %v969 = vpack.c.bf16 %v968, %v967
    %v974 = vunpack.c.l.b16 %v659
    %v975 = vunpack.c.l.b16 %v660
    %v976 = vunpack.c.l.b16 %v661
    %v977 = vunpack.c.l.b16 %v662
    %v978 = vpack.c.b16 %v975, %v974
    %v979 = vpack.c.b16 %v977, %v976
    %v983 = vsel %vm33, %v969, 0
    %985 = vmatpush.bf16.msra.mxu0 0
    %986 = vmatpush.bf16.msra.mxu0 0
    %987 = vmatpush.bf16.msra.mxu0 0
    %988 = vmatpush.bf16.msra.mxu0 0
    %989 = vmatpush.bf16.msra.mxu0 0
    %990 = vmatpush.bf16.msra.mxu0 0
    %991 = vmatpush.bf16.msra.mxu0 %v979
    %992 = vmatpush.bf16.msra.mxu0 %v978
    %993 = vmatmul.bf16.gmra.mxu0 %v983
    %v994 = vpop.f32.mrf.mxu0
    %v995 = vadd.f32 0.0, %v994
    %v996 = vpop.f32.mrf.mxu0
    %v997 = vadd.f32 0.0, %v996
    %998 = vdwg.mxu0
    %v999 = vadd.f32 %v583, %v995
    %v1000 = vadd.f32 %v584, %v997
    %v1001 = vld [vmem:[%s2 + $0x3] sm:$0x1]
    %v1002 = vmul.f32 %v999, %v999
    %v1003 = vmul.f32 %v1000, %v1000
    %v1004 = vsel %vm33, %v1002, 0.0
    %1005 = vadd.xlane.f32.xlu0 %v1004
    %v1006 = vpop.xlane.xlu0 %1005
    %v1007 = vsel %vm33, %v1003, 0.0
    %1008 = vadd.xlane.f32.xlu0 %v1007
    %v1009 = vpop.xlane.xlu0 %1008
    %v1010 = vmul.f32 %v1006, %v46
    %v1011 = vmul.f32 %v1009, %v46
    %v1012 = vadd.f32 %v1010, 1e-06
    %v1013 = vadd.f32 %v1011, 1e-06
    %v1014 = vrsqrt.pop %v1012
    %v1015 = vmul.f32 %v1014, %v1012
    %v1016 = vmul.f32 %v1015, %v1014
    %v1017 = vmul.f32 0.5, %v1016
    %v1018 = vsub.f32 1.5, %v1017
    %v1019 = vmul.f32 %v1014, %v1018
    %vm1020 = vweird.f32 %v1012
    %vm1021 = vweird.f32 %v1014
    %vm1022 = vmor %vm1020, %vm1021
    %v1023 = vsel %vm1022, %v1014, %v1019
    %v1024 = vrsqrt.pop %v1013
    %v1025 = vmul.f32 %v1024, %v1013
    %v1026 = vmul.f32 %v1025, %v1024
    %v1027 = vmul.f32 0.5, %v1026
    %v1028 = vsub.f32 1.5, %v1027
    %v1029 = vmul.f32 %v1024, %v1028
    %vm1030 = vweird.f32 %v1013
    %vm1031 = vweird.f32 %v1024
    %vm1032 = vmor %vm1030, %vm1031
    %v1033 = vsel %vm1032, %v1024, %v1029
    %v1034 = vmul.f32 %v999, %v1023
    %v1035 = vmul.f32 %v1000, %v1033
    %v1036 = vperm.slane %v1001, 0
    %v1037 = vmul.f32 %v1034, %v1036
    %v1038 = vmul.f32 %v1035, %v1036
    %v1039 = vpack.c.bf16 %v1038, %v1037
    %s1040 = scalar_lea.vmem %s4, 16
    %v1041 = vld [vmem:[%s1040] sm:$0xf]
    %v1042 = vld [vmem:[%s1040 + $0x4] sm:$0xf]
    %v1043 = vld [vmem:[%s1040 + $0x8] sm:$0xf]
    %v1044 = vld [vmem:[%s1040 + $0xc] sm:$0xf]
    %v1049 = vunpack.c.l.b16 %v1041
    %v1050 = vunpack.c.l.b16 %v1042
    %v1051 = vunpack.c.l.b16 %v1043
    %v1052 = vunpack.c.l.b16 %v1044
    %v1053 = vpack.c.b16 %v1050, %v1049
    %v1054 = vpack.c.b16 %v1052, %v1051
    %v1058 = vsel %vm33, %v1039, 0
    %1060 = vmatpush.bf16.msra.mxu0 0
    %1061 = vmatpush.bf16.msra.mxu0 0
    %1062 = vmatpush.bf16.msra.mxu0 0
    %1063 = vmatpush.bf16.msra.mxu0 0
    %1064 = vmatpush.bf16.msra.mxu0 0
    %1065 = vmatpush.bf16.msra.mxu0 0
    %1066 = vmatpush.bf16.msra.mxu0 %v1054
    %1067 = vmatpush.bf16.msra.mxu0 %v1053
    %1068 = vmatmul.bf16.gmra.mxu0 %v1058
    %v1069 = vpop.f32.mrf.mxu0
    %v1070 = vadd.f32 0.0, %v1069
    %v1071 = vpop.f32.mrf.mxu0
    %v1072 = vadd.f32 0.0, %v1071
    %1073 = vdwg.mxu0
    %v1074 = vmax.f32 %v1070, 0.0
    %v1075 = vmax.f32 %v1072, 0.0
    %v1076 = vpack.c.bf16 %v1075, %v1074
    %v1085 = vunpack.c.l.b16 %v663
    %v1086 = vunpack.c.l.b16 %v664
    %v1087 = vunpack.c.l.b16 %v665
    %v1088 = vunpack.c.l.b16 %v666
    %v1089 = vunpack.c.l.b16 %v667
    %v1090 = vunpack.c.l.b16 %v668
    %v1091 = vunpack.c.l.b16 %v669
    %v1092 = vunpack.c.l.b16 %v670
    %v1093 = vpack.c.b16 %v1086, %v1085
    %v1094 = vpack.c.b16 %v1088, %v1087
    %v1095 = vpack.c.b16 %v1090, %v1089
    %v1096 = vpack.c.b16 %v1092, %v1091
    %v1102 = vsel %vm565, %v1076, 0
    %1104 = vmatpush.bf16.msra.mxu0 0
    %1105 = vmatpush.bf16.msra.mxu0 0
    %1106 = vmatpush.bf16.msra.mxu0 0
    %1107 = vmatpush.bf16.msra.mxu0 0
    %1108 = vmatpush.bf16.msra.mxu0 %v1096
    %1109 = vmatpush.bf16.msra.mxu0 %v1095
    %1110 = vmatpush.bf16.msra.mxu0 %v1094
    %1111 = vmatpush.bf16.msra.mxu0 %v1093
    %1112 = vmatmul.bf16.gmra.mxu0 %v1102
    %v1113 = vpop.f32.mrf.mxu0
    %v1114 = vadd.f32 0.0, %v1113
    %v1115 = vpop.f32.mrf.mxu0
    %v1116 = vadd.f32 0.0, %v1115
    %1117 = vdwg.mxu0
    %v1118 = vadd.f32 %v999, %v1114
    %v1119 = vadd.f32 %v1000, %v1116
    %v1120 = vld [vmem:[%s2 + $0x4] sm:$0x1]
    %v1121 = vmul.f32 %v1118, %v1118
    %v1122 = vmul.f32 %v1119, %v1119
    %v1123 = vsel %vm33, %v1121, 0.0
    %1124 = vadd.xlane.f32.xlu0 %v1123
    %v1125 = vpop.xlane.xlu0 %1124
    %v1126 = vsel %vm33, %v1122, 0.0
    %1127 = vadd.xlane.f32.xlu0 %v1126
    %v1128 = vpop.xlane.xlu0 %1127
    %v1129 = vmul.f32 %v1125, %v46
    %v1130 = vmul.f32 %v1128, %v46
    %v1131 = vadd.f32 %v1129, 1e-06
    %v1132 = vadd.f32 %v1130, 1e-06
    %v1133 = vrsqrt.pop %v1131
    %v1134 = vmul.f32 %v1133, %v1131
    %v1135 = vmul.f32 %v1134, %v1133
    %v1136 = vmul.f32 0.5, %v1135
    %v1137 = vsub.f32 1.5, %v1136
    %v1138 = vmul.f32 %v1133, %v1137
    %vm1139 = vweird.f32 %v1131
    %vm1140 = vweird.f32 %v1133
    %vm1141 = vmor %vm1139, %vm1140
    %v1142 = vsel %vm1141, %v1133, %v1138
    %v1143 = vrsqrt.pop %v1132
    %v1144 = vmul.f32 %v1143, %v1132
    %v1145 = vmul.f32 %v1144, %v1143
    %v1146 = vmul.f32 0.5, %v1145
    %v1147 = vsub.f32 1.5, %v1146
    %v1148 = vmul.f32 %v1143, %v1147
    %vm1149 = vweird.f32 %v1132
    %vm1150 = vweird.f32 %v1143
    %vm1151 = vmor %vm1149, %vm1150
    %v1152 = vsel %vm1151, %v1143, %v1148
    %v1153 = vmul.f32 %v1118, %v1142
    %v1154 = vmul.f32 %v1119, %v1152
    %v1155 = vperm.slane %v1120, 0
    %v1156 = vmul.f32 %v1153, %v1155
    %v1157 = vmul.f32 %v1154, %v1155
    %v1158 = vsel %vm33, %v1156, 0.0
    %v1159 = vrot.slane %v1158, 4
    %v1160 = vadd.f32 %v1158, %v1159
    %v1161 = vrot.slane %v1160, 2
    %v1162 = vadd.f32 %v1160, %v1161
    %v1163 = vrot.slane %v1162, 1
    %v1164 = vadd.f32 %v1162, %v1163
    %v1165 = vsel %vm33, %v1157, 0.0
    %v1166 = vrot.slane %v1165, 4
    %v1167 = vadd.f32 %v1165, %v1166
    %v1168 = vrot.slane %v1167, 2
    %v1169 = vadd.f32 %v1167, %v1168
    %v1170 = vrot.slane %v1169, 1
    %v1171 = vadd.f32 %v1169, %v1170
    %vm1172 = vcmask 1040384
    %v1173 = vsel %vm1172, %v1164, %v1171
    %v1174 = vmul.f32 %v1173, 0.125
    %v1175 = vld [vmem:[%s6] sm:$0xff]
    %v1176 = vld [vmem:[%s6 + $0x8] sm:$0xff]
    %v1177 = vld [vmem:[%s6 + $0x10] sm:$0xff]
    %v1178 = vld [vmem:[%s6 + $0x18] sm:$0xff]
    %v1179 = vld [vmem:[%s6 + $0x20] sm:$0x1]
    %v1180 = vpack.c.bf16 %v1174, %v1174
    %v1181 = vpack.c.bf16 %v1176, %v1175
    %v1182 = vpack.c.bf16 %v1178, %v1177
    %v1183 = vperm.slane %v1179, 0
    %v1185 = vsel %vm33, %v1180, 0
    %1187 = vmatpush.bf16.msra.mxu0 0
    %1188 = vmatpush.bf16.msra.mxu0 0
    %1189 = vmatpush.bf16.msra.mxu0 0
    %1190 = vmatpush.bf16.msra.mxu0 0
    %1191 = vmatpush.bf16.msra.mxu0 0
    %1192 = vmatpush.bf16.msra.mxu0 0
    %1193 = vmatpush.bf16.msra.mxu0 %v1182
    %1194 = vmatpush.bf16.msra.mxu0 %v1181
    %1195 = vmatmul.bf16.gmra.mxu0 %v1185
    %v1196 = vpop.f32.mrf.mxu0
    %v1197 = vadd.f32 %v1183, %v1196
    %v1198 = vpop.f32.mrf.mxu0
    %1199 = vdwg.mxu0
    %vm1200 = vcmask 9216
    %1201 = vst.msk [vmem:[#allocation2] sm:$0x3] %vm1200, %v1197
    // Predicated region
    $region30: #{t5_finetuner_forward.1} parent=1 // pred_check
      _
    $region31: #{t5_finetuner_forward.1} parent=1 // pred_check_branch
      %1203 = sbr.rel (0) target = $region33
    $region32: #{t5_finetuner_forward.1} parent=1 // pred_region
      %1205 = vsyncadd [#allocation3], 0
      %s1207 = sshll.u32 [#allocation2], 4
      %s1208 = int_to_ptr.vmem [resolvable:$true] %s1207
      %s1209 = sshll.u32 %s7, 4
      %s1210 = int_to_ptr.hbm [resolvable:$true] %s1209
      %1212 = dma.vmem_to_hbm [thread:$0]  %s1208, 32, %s1210, [#allocation3]
    $region33: #{t5_finetuner_forward.1} parent=1 // pred_fallthru
      _
    // Predicated region
    $region34: #{t5_finetuner_forward.1} parent=1 // pred_check
      _
    $region35: #{t5_finetuner_forward.1} parent=1 // pred_check_branch
      %1214 = sbr.rel (0) target = $region37
    $region36: #{t5_finetuner_forward.1} parent=1 // pred_region
      %1216 = dma.done [#allocation3], 32
    $region37: #{t5_finetuner_forward.1} parent=1 // pred_fallthru
      _
    %1217 = vsyncpa [#allocation3], 1

</llo_original>
